<compile_context>
chip_gen: v5e
topology: v5e:2x2
jax: 0.10.0
libtpu: 0.0.40
codegen_flags: <defaults>
</compile_context>

<pallas_src>
import functools
import math

import jax
import jax.numpy as jnp
from jax import lax
from jax.experimental import pallas as pl
from jax.experimental.pallas import tpu as pltpu


def mha_kernel(x_ref, wq_ref, bq_ref, wkv_ref, bkv_ref, wp_ref, bp_ref, o_ref,
               k_scr, v_scr, *, num_heads, emb_size, n_block, num_q_tiles):
    """Grid = (batch, query-row tiles).

    x_ref    : (N, E)    bf16  full sequence of one batch element
    wq_ref   : (E, E)    bf16  Wq with 1/sqrt(E) folded in
    bq_ref   : (1, E)    f32   bq with 1/sqrt(E) folded in
    wkv_ref  : (E, 2E)   bf16  stacked Wk|Wv, (in, out)
    bkv_ref  : (1, 2E)   f32
    wp_ref   : (E, E)    bf16
    bp_ref   : (1, E)    f32
    o_ref    : (n_block, E) f32  query-row tile of the output
    k_scr / v_scr : (N, E) bf16  full-sequence K / V (persist across q tiles)
    """
    E = emb_size
    H = num_heads
    d = E // H
    qi = pl.program_id(1)

    # ---- K/V projection for the whole sequence, once per batch element, in
    # n_block-row chunks (no (N, 2E)/(N, 3E) full-sequence f32 temporary). ----
    @pl.when(qi == 0)
    def _():
        def project_chunk(c, carry):
            r = pl.multiple_of(c * n_block, n_block)
            xc = x_ref[pl.ds(r, n_block), :]                       # bf16 (n_block, E)
            kv = jnp.dot(xc, wkv_ref[...],
                         preferred_element_type=jnp.float32) + bkv_ref[...]
            k_scr[pl.ds(r, n_block), :] = kv[:, :E].astype(jnp.bfloat16)
            v_scr[pl.ds(r, n_block), :] = kv[:, E:].astype(jnp.bfloat16)
            return carry

        lax.fori_loop(0, num_q_tiles, project_chunk, 0,
                      unroll=num_q_tiles <= 8)

    # ---- Q projection for the current query tile only (no full-sequence Q
    # scratch).  The 1/sqrt(E) scaling is already folded into wq/bq. ----
    q_start = pl.multiple_of(qi * n_block, n_block)
    xq = x_ref[pl.ds(q_start, n_block), :]                          # bf16 (n_block, E)
    q_tile = (jnp.dot(xq, wq_ref[...], preferred_element_type=jnp.float32)
              + bq_ref[...]).astype(jnp.bfloat16)                   # (n_block, E)

    # ---- Per-head attention.  K/V are sliced from the refs per head; the
    # per-head context is contracted against the matching Wp rows right away
    # (full-lane accumulation, no masked d-wide stores). ----
    y = None
    for h in range(H):
        lo = h * d
        qh = q_tile[:, lo:lo + d]                                   # (n_block, d) bf16
        kh = k_scr[:, lo:lo + d]                                    # (N, d) bf16
        vh = v_scr[:, lo:lo + d]                                    # (N, d) bf16

        # energy = (q / sqrt(E)) @ k^T, contracting the last dims directly.
        energy = lax.dot_general(qh, kh, (((1,), (1,)), ((), ())),
                                 preferred_element_type=jnp.float32)  # (n_block, N)

        # softmax over keys: bf16 exp (EUP), f32 row sum, deferred normalization.
        m = jnp.max(energy, axis=-1, keepdims=True)
        p = jnp.exp((energy - m).astype(jnp.bfloat16))                # (n_block, N) bf16
        l = jnp.sum(p, axis=-1, keepdims=True, dtype=jnp.float32)     # (n_block, 1) f32
        # att_drop: nn.Dropout is identity at inference time.

        ctx = lax.dot_general(p, vh, (((1,), (0,)), ((), ())),
                              preferred_element_type=jnp.float32)     # (n_block, d)
        ctx = (ctx * pl.reciprocal(l, approx=True)).astype(jnp.bfloat16)

        # Partial output projection with this head's d rows of Wp.
        yh = jnp.dot(ctx, wp_ref[lo:lo + d, :],
                     preferred_element_type=jnp.float32)              # (n_block, E)
        y = yh if y is None else y + yh

    o_ref[...] = (y + bp_ref[...]).astype(o_ref.dtype)


def multi_head_attention(x, params, *, num_heads, n_block=None):
    """x: (B, N, E) float32. params: dict of torch-Linear-style (out, in) weights."""
    B, N, E = x.shape
    assert E % num_heads == 0
    if n_block is None:
        n_block = N if N <= 256 else 256
    assert N % n_block == 0, "sequence length must be divisible by n_block"
    n_q = N // n_block

    # scaling = emb_size ** (1/2) per the module; fold 1/sqrt(E) into Q proj.
    inv_scale = 1.0 / (E ** 0.5)

    x_bf16 = x.astype(jnp.bfloat16)
    wq = (params["wq"].T * inv_scale).astype(jnp.bfloat16)              # (E, E)
    bq = (params["bq"] * inv_scale).reshape(1, E).astype(jnp.float32)   # (1, E)
    wkv = jnp.concatenate([params["wk"].T, params["wv"].T],
                          axis=1).astype(jnp.bfloat16)                  # (E, 2E)
    bkv = jnp.concatenate([params["bk"], params["bv"]]
                          ).reshape(1, 2 * E).astype(jnp.float32)       # (1, 2E)
    wp = params["wp"].T.astype(jnp.bfloat16)                            # (E, E)
    bp = params["bp"].reshape(1, E).astype(jnp.float32)                 # (1, E)

    kernel = functools.partial(mha_kernel, num_heads=num_heads, emb_size=E,
                               n_block=n_block, num_q_tiles=n_q)

    # VMEM budget: K/V scratch + x block + weights + out block + score temps,
    # capped at 7/8 of physical VMEM (stays v7x-safe, uses v5e/v6e headroom).
    try:
        vmem_phys = pltpu.get_tpu_info().vmem_capacity_bytes
    except Exception:
        vmem_phys = 64 * 1024 * 1024  # conservative (v7x per-core VMEM)
    est_vmem = (2 * N * E * 2          # resident K / V scratch (bf16)
                + 2 * N * E * 2        # x block (double-buffered, bf16)
                + 4 * E * E * 2        # weights (single-buffered, bf16)
                + 2 * n_block * E * 4  # output block (double-buffered, f32)
                + 4 * n_block * N * 4  # per-head score/exp temporaries + slack
                + (2 << 20))           # Mosaic internal scratch headroom
    vmem_limit = min(int(vmem_phys * 7 // 8),
                     max(32 * 1024 * 1024, int(est_vmem)))

    cost = pl.CostEstimate(
        flops=int(B * (8 * N * E * E + 4 * N * N * E)),
        transcendentals=int(B * num_heads * N * N),
        bytes_accessed=int(B * N * E * (2 + 4) + 4 * E * E * 2 + 4 * E * 4),
    )

    const = lambda b, q: (0, 0)   # weights / biases: same block at every step

    def run(single_buffer_invariants):
        # Loop-invariant operands gain nothing from double buffering; single-
        # buffer them to cut VMEM.  x changes only with the batch index, but is
        # left default-buffered so the next batch element can still prefetch.
        wkw = ({"pipeline_mode": pl.Buffered(1)}
               if single_buffer_invariants else {})
        in_specs = [
            pl.BlockSpec((pl.Squeezed(), N, E), lambda b, q: (b, 0, 0)),   # x
            pl.BlockSpec((E, E), const, **wkw),                            # Wq
            pl.BlockSpec((1, E), const, **wkw),                            # bq
            pl.BlockSpec((E, 2 * E), const, **wkw),                        # Wk|Wv
            pl.BlockSpec((1, 2 * E), const, **wkw),                        # bk|bv
            pl.BlockSpec((E, E), const, **wkw),                            # Wp
            pl.BlockSpec((1, E), const, **wkw),                            # bp
        ]
        out = pl.pallas_call(
            kernel,
            out_shape=jax.ShapeDtypeStruct((B, N, E), jnp.float32),
            grid_spec=pltpu.PrefetchScalarGridSpec(
                num_scalar_prefetch=0,
                grid=(B, n_q),
                in_specs=in_specs,
                out_specs=pl.BlockSpec((pl.Squeezed(), n_block, E),
                                       lambda b, q: (b, q, 0)),
                scratch_shapes=[
                    pltpu.VMEM((N, E), jnp.bfloat16),   # K, full sequence
                    pltpu.VMEM((N, E), jnp.bfloat16),   # V, full sequence
                ],
            ),
            compiler_params=pltpu.CompilerParams(
                # Batch axis feeds both cores; the query-tile axis carries the
                # K/V scratch so it must stay sequential ("arbitrary").
                dimension_semantics=("parallel", "arbitrary"),
                vmem_limit_bytes=vmem_limit,
            ),
            cost_estimate=cost,
        )(x_bf16, wq, bq, wkv, bkv, wp, bp)
        return jax.block_until_ready(out)

    try:
        return run(True)
    except Exception:
        # pipeline_mode=pl.Buffered(1) not supported by this JAX build; fall
        # back to default double-buffered loop-invariant operands.
        return run(False)


def _init_linear(key, out_features, in_features):
    """Deterministic init mimicking torch.nn.Linear default (uniform +-1/sqrt(in))."""
    kw, kb = jax.random.split(key)
    bound = 1.0 / math.sqrt(in_features)
    w = jax.random.uniform(kw, (out_features, in_features), jnp.float32, -bound, bound)
    b = jax.random.uniform(kb, (out_features,), jnp.float32, -bound, bound)
    return w, b


def _reference(x, params, num_heads):
    """Pure-JAX f32 reference of the PyTorch forward (dropout = identity)."""
    B, N, E = x.shape
    d = E // num_heads

    def proj(w, b):
        return x @ w.T + b

    def split_heads(t):  # (B,N,E) -> (B,H,N,d)
        return t.reshape(B, N, num_heads, d).transpose(0, 2, 1, 3)

    q = split_heads(proj(params["wq"], params["bq"]))
    k = split_heads(proj(params["wk"], params["bk"]))
    v = split_heads(proj(params["wv"], params["bv"]))
    energy = jnp.einsum("bhqd,bhkd->bhqk", q, k)
    att = jax.nn.softmax(energy / (E ** 0.5), axis=-1)
    out = jnp.einsum("bhal,bhlv->bhav", att, v)
    out = out.transpose(0, 2, 1, 3).reshape(B, N, E)
    return out @ params["wp"].T + params["bp"]


if __name__ == "__main__":
    root = jax.random.PRNGKey(0)
    configs = [
        # (B, N, E, H, n_block)
        (2, 8, 32, 4, None),   # single query tile per batch element
        (2, 16, 32, 4, 8),     # tiled path: 2 q-tiles, chunked K/V projection
    ]
    for idx, (B, N, E, H, nb) in enumerate(configs):
        key = jax.random.fold_in(root, idx)
        kx, kq, kk, kv, kp = jax.random.split(key, 5)

        x = jax.random.normal(kx, (B, N, E), jnp.float32)
        wq, bq = _init_linear(kq, E, E)
        wk, bk = _init_linear(kk, E, E)
        wv, bv = _init_linear(kv, E, E)
        wp, bp = _init_linear(kp, E, E)
        params = dict(wq=wq, bq=bq, wk=wk, bk=bk, wv=wv, bv=bv, wp=wp, bp=bp)

        out = multi_head_attention(x, params, num_heads=H, n_block=nb)
        out = jax.block_until_ready(out)

        ref = _reference(x, params, H)
        assert out.shape == (B, N, E)
        err = float(jnp.max(jnp.abs(out - ref)))
        # bf16 input/operands, bf16 exp argument and pl.reciprocal(approx=True)
        # (rows don't sum exactly to 1) -> tolerance relaxed vs pure f32 math.
        assert jnp.allclose(out, ref, atol=4e-2, rtol=4e-2), err

    print("KERNEL_OK")
</pallas_src>

<mosaic_0001>
module attributes {stable_mosaic.version = 11 : i64} {
  func.func @mha_kernel(%arg0: i32, %arg1: i32, %arg2: memref<1x8x32xbf16, #tpu.memory_space<vmem>>, %arg3: memref<32x32xbf16, #tpu.memory_space<vmem>>, %arg4: memref<1x32xf32, #tpu.memory_space<vmem>>, %arg5: memref<32x64xbf16, #tpu.memory_space<vmem>>, %arg6: memref<1x64xf32, #tpu.memory_space<vmem>>, %arg7: memref<32x32xbf16, #tpu.memory_space<vmem>>, %arg8: memref<1x32xf32, #tpu.memory_space<vmem>>, %arg9: memref<1x8x32xf32, #tpu.memory_space<vmem>>, %arg10: memref<8x32xbf16, #tpu.memory_space<vmem>>, %arg11: memref<8x32xbf16, #tpu.memory_space<vmem>>) attributes {dimension_semantics = [#tpu.dimension_semantics<parallel>, #tpu.dimension_semantics<arbitrary>], iteration_bounds = array<i64: 2, 1>, scalar_prefetch = 0 : i64, scratch_operands = 2 : i64, tpu.core_type = #tpu.core_type<tc>, window_params = [{transform_indices = @transform_0, window_bounds = array<i64: 1, 8, 32>}, {pipeline_mode = #tpu.pipeline_mode<synchronous>, transform_indices = @transform_1, window_bounds = array<i64: 32, 32>}, {pipeline_mode = #tpu.pipeline_mode<synchronous>, transform_indices = @transform_2, window_bounds = array<i64: 1, 32>}, {pipeline_mode = #tpu.pipeline_mode<synchronous>, transform_indices = @transform_3, window_bounds = array<i64: 32, 64>}, {pipeline_mode = #tpu.pipeline_mode<synchronous>, transform_indices = @transform_4, window_bounds = array<i64: 1, 64>}, {pipeline_mode = #tpu.pipeline_mode<synchronous>, transform_indices = @transform_5, window_bounds = array<i64: 32, 32>}, {pipeline_mode = #tpu.pipeline_mode<synchronous>, transform_indices = @transform_6, window_bounds = array<i64: 1, 32>}, {transform_indices = @transform_7, window_bounds = array<i64: 1, 8, 32>}]} {
    %c0_i32 = arith.constant 0 : i32
    %0 = arith.cmpi eq, %arg1, %c0_i32 : i32
    %1 = arith.extui %0 : i1 to i32
    %c0_i32_0 = arith.constant 0 : i32
    %2 = arith.cmpi ne, %1, %c0_i32_0 : i32
    scf.if %2 {
      %c0_i32_52 = arith.constant 0 : i32
      %c8_i32_53 = arith.constant 8 : i32
      %103 = arith.muli %c0_i32_52, %c8_i32_53 : i32
      %104 = tpu.assume_multiple %103, 8 : i32
      %c0_54 = arith.constant 0 : index
      %105 = arith.index_cast %104 : i32 to index
      %c0_55 = arith.constant 0 : index
      %106 = vector.load %arg2[%c0_54, %105, %c0_55] : memref<1x8x32xbf16, #tpu.memory_space<vmem>>, vector<1x8x32xbf16>
      %107 = vector.shape_cast %106 : vector<1x8x32xbf16> to vector<8x32xbf16>
      %c0_56 = arith.constant 0 : index
      %c0_57 = arith.constant 0 : index
      %108 = vector.load %arg5[%c0_56, %c0_57] : memref<32x64xbf16, #tpu.memory_space<vmem>>, vector<32x64xbf16>
      %cst_58 = arith.constant dense<0.000000e+00> : vector<8x64xf32>
      %109 = tpu.matmul %107, %108, %cst_58 {dimension_numbers = #tpu.dot_dimension_numbers<[1], [0], [0], [1], [0, 0, 1, 1], [], []>} : vector<8x32xbf16>, vector<32x64xbf16>, vector<8x64xf32> -> vector<8x64xf32>
      %c0_59 = arith.constant 0 : index
      %c0_60 = arith.constant 0 : index
      %110 = vector.load %arg6[%c0_59, %c0_60] : memref<1x64xf32, #tpu.memory_space<vmem>>, vector<1x64xf32>
      %111 = vector.broadcast %110 : vector<1x64xf32> to vector<8x64xf32>
      %112 = arith.addf %109, %111 : vector<8x64xf32>
      %113 = vector.extract_strided_slice %112 {offsets = [0, 0], sizes = [8, 32], strides = [1, 1]} : vector<8x64xf32> to vector<8x32xf32>
      %114 = arith.truncf %113 : vector<8x32xf32> to vector<8x32xbf16>
      %115 = arith.index_cast %104 : i32 to index
      %c0_61 = arith.constant 0 : index
      %116 = vector.load %arg10[%115, %c0_61] : memref<8x32xbf16, #tpu.memory_space<vmem>>, vector<8x32xbf16>
      tpu.vector_store %arg10[%115, %c0_61], %114 {strides = array<i32>} : memref<8x32xbf16, #tpu.memory_space<vmem>>, vector<8x32xbf16>,
      %117 = vector.extract_strided_slice %112 {offsets = [0, 32], sizes = [8, 32], strides = [1, 1]} : vector<8x64xf32> to vector<8x32xf32>
      %118 = arith.truncf %117 : vector<8x32xf32> to vector<8x32xbf16>
      %119 = arith.index_cast %104 : i32 to index
      %c0_62 = arith.constant 0 : index
      %120 = vector.load %arg11[%119, %c0_62] : memref<8x32xbf16, #tpu.memory_space<vmem>>, vector<8x32xbf16>
      tpu.vector_store %arg11[%119, %c0_62], %118 {strides = array<i32>} : memref<8x32xbf16, #tpu.memory_space<vmem>>, vector<8x32xbf16>,
      %c1_i32 = arith.constant 1 : i32
    } else {
    }
    %c8_i32 = arith.constant 8 : i32
    %3 = arith.muli %arg1, %c8_i32 : i32
    %4 = tpu.assume_multiple %3, 8 : i32
    %c0 = arith.constant 0 : index
    %5 = arith.index_cast %4 : i32 to index
    %c0_1 = arith.constant 0 : index
    %6 = vector.load %arg2[%c0, %5, %c0_1] : memref<1x8x32xbf16, #tpu.memory_space<vmem>>, vector<1x8x32xbf16>
    %7 = vector.shape_cast %6 : vector<1x8x32xbf16> to vector<8x32xbf16>
    %c0_2 = arith.constant 0 : index
    %c0_3 = arith.constant 0 : index
    %8 = vector.load %arg3[%c0_2, %c0_3] : memref<32x32xbf16, #tpu.memory_space<vmem>>, vector<32x32xbf16>
    %cst = arith.constant dense<0.000000e+00> : vector<8x32xf32>
    %9 = tpu.matmul %7, %8, %cst {dimension_numbers = #tpu.dot_dimension_numbers<[1], [0], [0], [1], [0, 0, 1, 1], [], []>} : vector<8x32xbf16>, vector<32x32xbf16>, vector<8x32xf32> -> vector<8x32xf32>
    %c0_4 = arith.constant 0 : index
    %c0_5 = arith.constant 0 : index
    %10 = vector.load %arg4[%c0_4, %c0_5] : memref<1x32xf32, #tpu.memory_space<vmem>>, vector<1x32xf32>
    %11 = vector.broadcast %10 : vector<1x32xf32> to vector<8x32xf32>
    %12 = arith.addf %9, %11 : vector<8x32xf32>
    %13 = arith.truncf %12 : vector<8x32xf32> to vector<8x32xbf16>
    %14 = vector.extract_strided_slice %13 {offsets = [0, 0], sizes = [8, 8], strides = [1, 1]} : vector<8x32xbf16> to vector<8x8xbf16>
    %c0_6 = arith.constant 0 : index
    %c0_7 = arith.constant 0 : index
    %15 = vector.load %arg10[%c0_6, %c0_7] : memref<8x32xbf16, #tpu.memory_space<vmem>>, vector<8x8xbf16>
    %c0_8 = arith.constant 0 : index
    %c0_9 = arith.constant 0 : index
    %16 = vector.load %arg11[%c0_8, %c0_9] : memref<8x32xbf16, #tpu.memory_space<vmem>>, vector<8x8xbf16>
    %cst_10 = arith.constant dense<0.000000e+00> : vector<8x8xf32>
    %17 = tpu.matmul %14, %15, %cst_10 {dimension_numbers = #tpu.dot_dimension_numbers<[1], [1], [0], [0], [0, 0, 1, 0], [], []>} : vector<8x8xbf16>, vector<8x8xbf16>, vector<8x8xf32> -> vector<8x8xf32>
    %cst_11 = arith.constant dense<0xFF800000> : vector<8xf32>
    %18 = vector.multi_reduction <maximumf>, %17, %cst_11 [1] : vector<8x8xf32> to vector<8xf32>
    %19 = vector.shape_cast %18 : vector<8xf32> to vector<8x1xf32>
    %20 = vector.broadcast %19 : vector<8x1xf32> to vector<8x8xf32>
    %21 = arith.subf %17, %20 : vector<8x8xf32>
    %22 = arith.truncf %21 : vector<8x8xf32> to vector<8x8xbf16>
    %23 = math.exp %22 : vector<8x8xbf16>
    %24 = arith.extf %23 : vector<8x8xbf16> to vector<8x8xf32>
    %cst_12 = arith.constant dense<0.000000e+00> : vector<8xf32>
    %25 = vector.multi_reduction <add>, %24, %cst_12 [1] : vector<8x8xf32> to vector<8xf32>
    %26 = vector.shape_cast %25 : vector<8xf32> to vector<8x1xf32>
    %cst_13 = arith.constant dense<0.000000e+00> : vector<8x8xf32>
    %27 = tpu.matmul %23, %16, %cst_13 {dimension_numbers = #tpu.dot_dimension_numbers<[1], [0], [0], [1], [0, 0, 1, 1], [], []>} : vector<8x8xbf16>, vector<8x8xbf16>, vector<8x8xf32> -> vector<8x8xf32>
    %28 = tpu.reciprocal %26 {approx = true} : vector<8x1xf32> -> vector<8x1xf32>
    %29 = vector.broadcast %28 : vector<8x1xf32> to vector<8x8xf32>
    %30 = arith.mulf %27, %29 : vector<8x8xf32>
    %31 = arith.truncf %30 : vector<8x8xf32> to vector<8x8xbf16>
    %c0_14 = arith.constant 0 : index
    %c0_15 = arith.constant 0 : index
    %32 = vector.load %arg7[%c0_14, %c0_15] : memref<32x32xbf16, #tpu.memory_space<vmem>>, vector<8x32xbf16>
    %cst_16 = arith.constant dense<0.000000e+00> : vector<8x32xf32>
    %33 = tpu.matmul %31, %32, %cst_16 {dimension_numbers = #tpu.dot_dimension_numbers<[1], [0], [0], [1], [0, 0, 1, 1], [], []>} : vector<8x8xbf16>, vector<8x32xbf16>, vector<8x32xf32> -> vector<8x32xf32>
    %34 = vector.extract_strided_slice %13 {offsets = [0, 8], sizes = [8, 8], strides = [1, 1]} : vector<8x32xbf16> to vector<8x8xbf16>
    %c0_17 = arith.constant 0 : index
    %c8 = arith.constant 8 : index
    %35 = vector.load %arg10[%c0_17, %c8] : memref<8x32xbf16, #tpu.memory_space<vmem>>, vector<8x8xbf16>
    %c0_18 = arith.constant 0 : index
    %c8_19 = arith.constant 8 : index
    %36 = vector.load %arg11[%c0_18, %c8_19] : memref<8x32xbf16, #tpu.memory_space<vmem>>, vector<8x8xbf16>
    %cst_20 = arith.constant dense<0.000000e+00> : vector<8x8xf32>
    %37 = tpu.matmul %34, %35, %cst_20 {dimension_numbers = #tpu.dot_dimension_numbers<[1], [1], [0], [0], [0, 0, 1, 0], [], []>} : vector<8x8xbf16>, vector<8x8xbf16>, vector<8x8xf32> -> vector<8x8xf32>
    %cst_21 = arith.constant dense<0xFF800000> : vector<8xf32>
    %38 = vector.multi_reduction <maximumf>, %37, %cst_21 [1] : vector<8x8xf32> to vector<8xf32>
    %39 = vector.shape_cast %38 : vector<8xf32> to vector<8x1xf32>
    %40 = vector.broadcast %39 : vector<8x1xf32> to vector<8x8xf32>
    %41 = arith.subf %37, %40 : vector<8x8xf32>
    %42 = arith.truncf %41 : vector<8x8xf32> to vector<8x8xbf16>
    %43 = math.exp %42 : vector<8x8xbf16>
    %44 = arith.extf %43 : vector<8x8xbf16> to vector<8x8xf32>
    %cst_22 = arith.constant dense<0.000000e+00> : vector<8xf32>
    %45 = vector.multi_reduction <add>, %44, %cst_22 [1] : vector<8x8xf32> to vector<8xf32>
    %46 = vector.shape_cast %45 : vector<8xf32> to vector<8x1xf32>
    %cst_23 = arith.constant dense<0.000000e+00> : vector<8x8xf32>
    %47 = tpu.matmul %43, %36, %cst_23 {dimension_numbers = #tpu.dot_dimension_numbers<[1], [0], [0], [1], [0, 0, 1, 1], [], []>} : vector<8x8xbf16>, vector<8x8xbf16>, vector<8x8xf32> -> vector<8x8xf32>
    %48 = tpu.reciprocal %46 {approx = true} : vector<8x1xf32> -> vector<8x1xf32>
    %49 = vector.broadcast %48 : vector<8x1xf32> to vector<8x8xf32>
    %50 = arith.mulf %47, %49 : vector<8x8xf32>
    %51 = arith.truncf %50 : vector<8x8xf32> to vector<8x8xbf16>
    %c8_24 = arith.constant 8 : index
    %c0_25 = arith.constant 0 : index
    %52 = vector.load %arg7[%c8_24, %c0_25] : memref<32x32xbf16, #tpu.memory_space<vmem>>, vector<8x32xbf16>
    %cst_26 = arith.constant dense<0.000000e+00> : vector<8x32xf32>
    %53 = tpu.matmul %51, %52, %cst_26 {dimension_numbers = #tpu.dot_dimension_numbers<[1], [0], [0], [1], [0, 0, 1, 1], [], []>} : vector<8x8xbf16>, vector<8x32xbf16>, vector<8x32xf32> -> vector<8x32xf32>
    %54 = arith.addf %33, %53 : vector<8x32xf32>
    %55 = vector.extract_strided_slice %13 {offsets = [0, 16], sizes = [8, 8], strides = [1, 1]} : vector<8x32xbf16> to vector<8x8xbf16>
    %c0_27 = arith.constant 0 : index
    %c16 = arith.constant 16 : index
    %56 = vector.load %arg10[%c0_27, %c16] : memref<8x32xbf16, #tpu.memory_space<vmem>>, vector<8x8xbf16>
    %c0_28 = arith.constant 0 : index
    %c16_29 = arith.constant 16 : index
    %57 = vector.load %arg11[%c0_28, %c16_29] : memref<8x32xbf16, #tpu.memory_space<vmem>>, vector<8x8xbf16>
    %cst_30 = arith.constant dense<0.000000e+00> : vector<8x8xf32>
    %58 = tpu.matmul %55, %56, %cst_30 {dimension_numbers = #tpu.dot_dimension_numbers<[1], [1], [0], [0], [0, 0, 1, 0], [], []>} : vector<8x8xbf16>, vector<8x8xbf16>, vector<8x8xf32> -> vector<8x8xf32>
    %cst_31 = arith.constant dense<0xFF800000> : vector<8xf32>
    %59 = vector.multi_reduction <maximumf>, %58, %cst_31 [1] : vector<8x8xf32> to vector<8xf32>
    %60 = vector.shape_cast %59 : vector<8xf32> to vector<8x1xf32>
    %61 = vector.broadcast %60 : vector<8x1xf32> to vector<8x8xf32>
    %62 = arith.subf %58, %61 : vector<8x8xf32>
    %63 = arith.truncf %62 : vector<8x8xf32> to vector<8x8xbf16>
    %64 = math.exp %63 : vector<8x8xbf16>
    %65 = arith.extf %64 : vector<8x8xbf16> to vector<8x8xf32>
    %cst_32 = arith.constant dense<0.000000e+00> : vector<8xf32>
    %66 = vector.multi_reduction <add>, %65, %cst_32 [1] : vector<8x8xf32> to vector<8xf32>
    %67 = vector.shape_cast %66 : vector<8xf32> to vector<8x1xf32>
    %cst_33 = arith.constant dense<0.000000e+00> : vector<8x8xf32>
    %68 = tpu.matmul %64, %57, %cst_33 {dimension_numbers = #tpu.dot_dimension_numbers<[1], [0], [0], [1], [0, 0, 1, 1], [], []>} : vector<8x8xbf16>, vector<8x8xbf16>, vector<8x8xf32> -> vector<8x8xf32>
    %69 = tpu.reciprocal %67 {approx = true} : vector<8x1xf32> -> vector<8x1xf32>
    %70 = vector.broadcast %69 : vector<8x1xf32> to vector<8x8xf32>
    %71 = arith.mulf %68, %70 : vector<8x8xf32>
    %72 = arith.truncf %71 : vector<8x8xf32> to vector<8x8xbf16>
    %c16_34 = arith.constant 16 : index
    %c0_35 = arith.constant 0 : index
    %73 = vector.load %arg7[%c16_34, %c0_35] : memref<32x32xbf16, #tpu.memory_space<vmem>>, vector<8x32xbf16>
    %cst_36 = arith.constant dense<0.000000e+00> : vector<8x32xf32>
    %74 = tpu.matmul %72, %73, %cst_36 {dimension_numbers = #tpu.dot_dimension_numbers<[1], [0], [0], [1], [0, 0, 1, 1], [], []>} : vector<8x8xbf16>, vector<8x32xbf16>, vector<8x32xf32> -> vector<8x32xf32>
    %75 = arith.addf %54, %74 : vector<8x32xf32>
    %76 = vector.extract_strided_slice %13 {offsets = [0, 24], sizes = [8, 8], strides = [1, 1]} : vector<8x32xbf16> to vector<8x8xbf16>
    %c0_37 = arith.constant 0 : index
    %c24 = arith.constant 24 : index
    %77 = vector.load %arg10[%c0_37, %c24] : memref<8x32xbf16, #tpu.memory_space<vmem>>, vector<8x8xbf16>
    %c0_38 = arith.constant 0 : index
    %c24_39 = arith.constant 24 : index
    %78 = vector.load %arg11[%c0_38, %c24_39] : memref<8x32xbf16, #tpu.memory_space<vmem>>, vector<8x8xbf16>
    %cst_40 = arith.constant dense<0.000000e+00> : vector<8x8xf32>
    %79 = tpu.matmul %76, %77, %cst_40 {dimension_numbers = #tpu.dot_dimension_numbers<[1], [1], [0], [0], [0, 0, 1, 0], [], []>} : vector<8x8xbf16>, vector<8x8xbf16>, vector<8x8xf32> -> vector<8x8xf32>
    %cst_41 = arith.constant dense<0xFF800000> : vector<8xf32>
    %80 = vector.multi_reduction <maximumf>, %79, %cst_41 [1] : vector<8x8xf32> to vector<8xf32>
    %81 = vector.shape_cast %80 : vector<8xf32> to vector<8x1xf32>
    %82 = vector.broadcast %81 : vector<8x1xf32> to vector<8x8xf32>
    %83 = arith.subf %79, %82 : vector<8x8xf32>
    %84 = arith.truncf %83 : vector<8x8xf32> to vector<8x8xbf16>
    %85 = math.exp %84 : vector<8x8xbf16>
    %86 = arith.extf %85 : vector<8x8xbf16> to vector<8x8xf32>
    %cst_42 = arith.constant dense<0.000000e+00> : vector<8xf32>
    %87 = vector.multi_reduction <add>, %86, %cst_42 [1] : vector<8x8xf32> to vector<8xf32>
    %88 = vector.shape_cast %87 : vector<8xf32> to vector<8x1xf32>
    %cst_43 = arith.constant dense<0.000000e+00> : vector<8x8xf32>
    %89 = tpu.matmul %85, %78, %cst_43 {dimension_numbers = #tpu.dot_dimension_numbers<[1], [0], [0], [1], [0, 0, 1, 1], [], []>} : vector<8x8xbf16>, vector<8x8xbf16>, vector<8x8xf32> -> vector<8x8xf32>
    %90 = tpu.reciprocal %88 {approx = true} : vector<8x1xf32> -> vector<8x1xf32>
    %91 = vector.broadcast %90 : vector<8x1xf32> to vector<8x8xf32>
    %92 = arith.mulf %89, %91 : vector<8x8xf32>
    %93 = arith.truncf %92 : vector<8x8xf32> to vector<8x8xbf16>
    %c24_44 = arith.constant 24 : index
    %c0_45 = arith.constant 0 : index
    %94 = vector.load %arg7[%c24_44, %c0_45] : memref<32x32xbf16, #tpu.memory_space<vmem>>, vector<8x32xbf16>
    %cst_46 = arith.constant dense<0.000000e+00> : vector<8x32xf32>
    %95 = tpu.matmul %93, %94, %cst_46 {dimension_numbers = #tpu.dot_dimension_numbers<[1], [0], [0], [1], [0, 0, 1, 1], [], []>} : vector<8x8xbf16>, vector<8x32xbf16>, vector<8x32xf32> -> vector<8x32xf32>
    %96 = arith.addf %75, %95 : vector<8x32xf32>
    %c0_47 = arith.constant 0 : index
    %c0_48 = arith.constant 0 : index
    %97 = vector.load %arg8[%c0_47, %c0_48] : memref<1x32xf32, #tpu.memory_space<vmem>>, vector<1x32xf32>
    %98 = vector.broadcast %97 : vector<1x32xf32> to vector<8x32xf32>
    %99 = arith.addf %96, %98 : vector<8x32xf32>
    %c0_49 = arith.constant 0 : index
    %c0_50 = arith.constant 0 : index
    %c0_51 = arith.constant 0 : index
    %100 = vector.load %arg9[%c0_49, %c0_50, %c0_51] : memref<1x8x32xf32, #tpu.memory_space<vmem>>, vector<1x8x32xf32>
    %101 = vector.shape_cast %100 : vector<1x8x32xf32> to vector<8x32xf32>
    %102 = vector.shape_cast %99 : vector<8x32xf32> to vector<1x8x32xf32>
    tpu.vector_store %arg9[%c0_49, %c0_50, %c0_51], %102 {strides = array<i32>} : memref<1x8x32xf32, #tpu.memory_space<vmem>>, vector<1x8x32xf32>,
    return
  }
  func.func @transform_0(%arg0: i32, %arg1: i32) -> (i32, i32, i32) {
    %c0_i32 = arith.constant 0 : i32
    %c0_i32_0 = arith.constant 0 : i32
    %c0_i32_1 = arith.constant 0 : i32
    return %arg0, %c0_i32, %c0_i32_0 : i32, i32, i32
  }
  func.func @transform_1(%arg0: i32, %arg1: i32) -> (i32, i32) {
    %c0_i32 = arith.constant 0 : i32
    %c0_i32_0 = arith.constant 0 : i32
    %c0_i32_1 = arith.constant 0 : i32
    return %c0_i32, %c0_i32_0 : i32, i32
  }
  func.func @transform_2(%arg0: i32, %arg1: i32) -> (i32, i32) {
    %c0_i32 = arith.constant 0 : i32
    %c0_i32_0 = arith.constant 0 : i32
    %c0_i32_1 = arith.constant 0 : i32
    return %c0_i32, %c0_i32_0 : i32, i32
  }
  func.func @transform_3(%arg0: i32, %arg1: i32) -> (i32, i32) {
    %c0_i32 = arith.constant 0 : i32
    %c0_i32_0 = arith.constant 0 : i32
    %c0_i32_1 = arith.constant 0 : i32
    return %c0_i32, %c0_i32_0 : i32, i32
  }
  func.func @transform_4(%arg0: i32, %arg1: i32) -> (i32, i32) {
    %c0_i32 = arith.constant 0 : i32
    %c0_i32_0 = arith.constant 0 : i32
    %c0_i32_1 = arith.constant 0 : i32
    return %c0_i32, %c0_i32_0 : i32, i32
  }
  func.func @transform_5(%arg0: i32, %arg1: i32) -> (i32, i32) {
    %c0_i32 = arith.constant 0 : i32
    %c0_i32_0 = arith.constant 0 : i32
    %c0_i32_1 = arith.constant 0 : i32
    return %c0_i32, %c0_i32_0 : i32, i32
  }
  func.func @transform_6(%arg0: i32, %arg1: i32) -> (i32, i32) {
    %c0_i32 = arith.constant 0 : i32
    %c0_i32_0 = arith.constant 0 : i32
    %c0_i32_1 = arith.constant 0 : i32
    return %c0_i32, %c0_i32_0 : i32, i32
  }
  func.func @transform_7(%arg0: i32, %arg1: i32) -> (i32, i32, i32) {
    %c0_i32 = arith.constant 0 : i32
    %c0_i32_0 = arith.constant 0 : i32
    return %arg0, %arg1, %c0_i32 : i32, i32, i32
  }
}

module attributes {stable_mosaic.version = 11 : i64} {
  func.func @mha_kernel(%arg0: i32, %arg1: i32, %arg2: memref<1x8x32xbf16, #tpu.memory_space<vmem>>, %arg3: memref<32x32xbf16, #tpu.memory_space<vmem>>, %arg4: memref<1x32xf32, #tpu.memory_space<vmem>>, %arg5: memref<32x64xbf16, #tpu.memory_space<vmem>>, %arg6: memref<1x64xf32, #tpu.memory_space<vmem>>, %arg7: memref<32x32xbf16, #tpu.memory_space<vmem>>, %arg8: memref<1x32xf32, #tpu.memory_space<vmem>>, %arg9: memref<1x8x32xf32, #tpu.memory_space<vmem>>, %arg10: memref<8x32xbf16, #tpu.memory_space<vmem>>, %arg11: memref<8x32xbf16, #tpu.memory_space<vmem>>) attributes {dimension_semantics = [#tpu.dimension_semantics<parallel>, #tpu.dimension_semantics<arbitrary>], iteration_bounds = array<i64: 2, 1>, scalar_prefetch = 0 : i64, scratch_operands = 2 : i64, tpu.core_type = #tpu.core_type<tc>, window_params = [{transform_indices = @transform_0, window_bounds = array<i64: 1, 8, 32>}, {pipeline_mode = #tpu.pipeline_mode<synchronous>, transform_indices = @transform_1, window_bounds = array<i64: 32, 32>}, {pipeline_mode = #tpu.pipeline_mode<synchronous>, transform_indices = @transform_2, window_bounds = array<i64: 1, 32>}, {pipeline_mode = #tpu.pipeline_mode<synchronous>, transform_indices = @transform_3, window_bounds = array<i64: 32, 64>}, {pipeline_mode = #tpu.pipeline_mode<synchronous>, transform_indices = @transform_4, window_bounds = array<i64: 1, 64>}, {pipeline_mode = #tpu.pipeline_mode<synchronous>, transform_indices = @transform_5, window_bounds = array<i64: 32, 32>}, {pipeline_mode = #tpu.pipeline_mode<synchronous>, transform_indices = @transform_6, window_bounds = array<i64: 1, 32>}, {transform_indices = @transform_7, window_bounds = array<i64: 1, 8, 32>}]} {
    %c0_i32 = arith.constant 0 : i32
    %0 = arith.cmpi eq, %arg1, %c0_i32 : i32
    %1 = arith.extui %0 : i1 to i32
    %c0_i32_0 = arith.constant 0 : i32
    %2 = arith.cmpi ne, %1, %c0_i32_0 : i32
    scf.if %2 {
      %c0_i32_52 = arith.constant 0 : i32
      %c8_i32_53 = arith.constant 8 : i32
      %103 = arith.muli %c0_i32_52, %c8_i32_53 : i32
      %104 = tpu.assume_multiple %103, 8 : i32
      %c0_54 = arith.constant 0 : index
      %105 = arith.index_cast %104 : i32 to index
      %c0_55 = arith.constant 0 : index
      %106 = vector.load %arg2[%c0_54, %105, %c0_55] : memref<1x8x32xbf16, #tpu.memory_space<vmem>>, vector<1x8x32xbf16>
      %107 = vector.shape_cast %106 : vector<1x8x32xbf16> to vector<8x32xbf16>
      %c0_56 = arith.constant 0 : index
      %c0_57 = arith.constant 0 : index
      %108 = vector.load %arg5[%c0_56, %c0_57] : memref<32x64xbf16, #tpu.memory_space<vmem>>, vector<32x64xbf16>
      %cst_58 = arith.constant dense<0.000000e+00> : vector<8x64xf32>
      %109 = tpu.matmul %107, %108, %cst_58 {dimension_numbers = #tpu.dot_dimension_numbers<[1], [0], [0], [1], [0, 0, 1, 1], [], []>} : vector<8x32xbf16>, vector<32x64xbf16>, vector<8x64xf32> -> vector<8x64xf32>
      %c0_59 = arith.constant 0 : index
      %c0_60 = arith.constant 0 : index
      %110 = vector.load %arg6[%c0_59, %c0_60] : memref<1x64xf32, #tpu.memory_space<vmem>>, vector<1x64xf32>
      %111 = vector.broadcast %110 : vector<1x64xf32> to vector<8x64xf32>
      %112 = arith.addf %109, %111 : vector<8x64xf32>
      %113 = vector.extract_strided_slice %112 {offsets = [0, 0], sizes = [8, 32], strides = [1, 1]} : vector<8x64xf32> to vector<8x32xf32>
      %114 = arith.truncf %113 : vector<8x32xf32> to vector<8x32xbf16>
      %115 = arith.index_cast %104 : i32 to index
      %c0_61 = arith.constant 0 : index
      %116 = vector.load %arg10[%115, %c0_61] : memref<8x32xbf16, #tpu.memory_space<vmem>>, vector<8x32xbf16>
      tpu.vector_store %arg10[%115, %c0_61], %114 {strides = array<i32>} : memref<8x32xbf16, #tpu.memory_space<vmem>>, vector<8x32xbf16>,
      %117 = vector.extract_strided_slice %112 {offsets = [0, 32], sizes = [8, 32], strides = [1, 1]} : vector<8x64xf32> to vector<8x32xf32>
      %118 = arith.truncf %117 : vector<8x32xf32> to vector<8x32xbf16>
      %119 = arith.index_cast %104 : i32 to index
      %c0_62 = arith.constant 0 : index
      %120 = vector.load %arg11[%119, %c0_62] : memref<8x32xbf16, #tpu.memory_space<vmem>>, vector<8x32xbf16>
      tpu.vector_store %arg11[%119, %c0_62], %118 {strides = array<i32>} : memref<8x32xbf16, #tpu.memory_space<vmem>>, vector<8x32xbf16>,
      %c1_i32 = arith.constant 1 : i32
    } else {
    }
    %c8_i32 = arith.constant 8 : i32
    %3 = arith.muli %arg1, %c8_i32 : i32
    %4 = tpu.assume_multiple %3, 8 : i32
    %c0 = arith.constant 0 : index
    %5 = arith.index_cast %4 : i32 to index
    %c0_1 = arith.constant 0 : index
    %6 = vector.load %arg2[%c0, %5, %c0_1] : memref<1x8x32xbf16, #tpu.memory_space<vmem>>, vector<1x8x32xbf16>
    %7 = vector.shape_cast %6 : vector<1x8x32xbf16> to vector<8x32xbf16>
    %c0_2 = arith.constant 0 : index
    %c0_3 = arith.constant 0 : index
    %8 = vector.load %arg3[%c0_2, %c0_3] : memref<32x32xbf16, #tpu.memory_space<vmem>>, vector<32x32xbf16>
    %cst = arith.constant dense<0.000000e+00> : vector<8x32xf32>
    %9 = tpu.matmul %7, %8, %cst {dimension_numbers = #tpu.dot_dimension_numbers<[1], [0], [0], [1], [0, 0, 1, 1], [], []>} : vector<8x32xbf16>, vector<32x32xbf16>, vector<8x32xf32> -> vector<8x32xf32>
    %c0_4 = arith.constant 0 : index
    %c0_5 = arith.constant 0 : index
    %10 = vector.load %arg4[%c0_4, %c0_5] : memref<1x32xf32, #tpu.memory_space<vmem>>, vector<1x32xf32>
    %11 = vector.broadcast %10 : vector<1x32xf32> to vector<8x32xf32>
    %12 = arith.addf %9, %11 : vector<8x32xf32>
    %13 = arith.truncf %12 : vector<8x32xf32> to vector<8x32xbf16>
    %14 = vector.extract_strided_slice %13 {offsets = [0, 0], sizes = [8, 8], strides = [1, 1]} : vector<8x32xbf16> to vector<8x8xbf16>
    %c0_6 = arith.constant 0 : index
    %c0_7 = arith.constant 0 : index
    %15 = vector.load %arg10[%c0_6, %c0_7] : memref<8x32xbf16, #tpu.memory_space<vmem>>, vector<8x8xbf16>
    %c0_8 = arith.constant 0 : index
    %c0_9 = arith.constant 0 : index
    %16 = vector.load %arg11[%c0_8, %c0_9] : memref<8x32xbf16, #tpu.memory_space<vmem>>, vector<8x8xbf16>
    %cst_10 = arith.constant dense<0.000000e+00> : vector<8x8xf32>
    %17 = tpu.matmul %14, %15, %cst_10 {dimension_numbers = #tpu.dot_dimension_numbers<[1], [1], [0], [0], [0, 0, 1, 0], [], []>} : vector<8x8xbf16>, vector<8x8xbf16>, vector<8x8xf32> -> vector<8x8xf32>
    %cst_11 = arith.constant dense<0xFF800000> : vector<8xf32>
    %18 = vector.multi_reduction <maximumf>, %17, %cst_11 [1] : vector<8x8xf32> to vector<8xf32>
    %19 = vector.shape_cast %18 : vector<8xf32> to vector<8x1xf32>
    %20 = vector.broadcast %19 : vector<8x1xf32> to vector<8x8xf32>
    %21 = arith.subf %17, %20 : vector<8x8xf32>
    %22 = arith.truncf %21 : vector<8x8xf32> to vector<8x8xbf16>
    %23 = math.exp %22 : vector<8x8xbf16>
    %24 = arith.extf %23 : vector<8x8xbf16> to vector<8x8xf32>
    %cst_12 = arith.constant dense<0.000000e+00> : vector<8xf32>
    %25 = vector.multi_reduction <add>, %24, %cst_12 [1] : vector<8x8xf32> to vector<8xf32>
    %26 = vector.shape_cast %25 : vector<8xf32> to vector<8x1xf32>
    %cst_13 = arith.constant dense<0.000000e+00> : vector<8x8xf32>
    %27 = tpu.matmul %23, %16, %cst_13 {dimension_numbers = #tpu.dot_dimension_numbers<[1], [0], [0], [1], [0, 0, 1, 1], [], []>} : vector<8x8xbf16>, vector<8x8xbf16>, vector<8x8xf32> -> vector<8x8xf32>
    %28 = tpu.reciprocal %26 {approx = true} : vector<8x1xf32> -> vector<8x1xf32>
    %29 = vector.broadcast %28 : vector<8x1xf32> to vector<8x8xf32>
    %30 = arith.mulf %27, %29 : vector<8x8xf32>
    %31 = arith.truncf %30 : vector<8x8xf32> to vector<8x8xbf16>
    %c0_14 = arith.constant 0 : index
    %c0_15 = arith.constant 0 : index
    %32 = vector.load %arg7[%c0_14, %c0_15] : memref<32x32xbf16, #tpu.memory_space<vmem>>, vector<8x32xbf16>
    %cst_16 = arith.constant dense<0.000000e+00> : vector<8x32xf32>
    %33 = tpu.matmul %31, %32, %cst_16 {dimension_numbers = #tpu.dot_dimension_numbers<[1], [0], [0], [1], [0, 0, 1, 1], [], []>} : vector<8x8xbf16>, vector<8x32xbf16>, vector<8x32xf32> -> vector<8x32xf32>
    %34 = vector.extract_strided_slice %13 {offsets = [0, 8], sizes = [8, 8], strides = [1, 1]} : vector<8x32xbf16> to vector<8x8xbf16>
    %c0_17 = arith.constant 0 : index
    %c8 = arith.constant 8 : index
    %35 = vector.load %arg10[%c0_17, %c8] : memref<8x32xbf16, #tpu.memory_space<vmem>>, vector<8x8xbf16>
    %c0_18 = arith.constant 0 : index
    %c8_19 = arith.constant 8 : index
    %36 = vector.load %arg11[%c0_18, %c8_19] : memref<8x32xbf16, #tpu.memory_space<vmem>>, vector<8x8xbf16>
    %cst_20 = arith.constant dense<0.000000e+00> : vector<8x8xf32>
    %37 = tpu.matmul %34, %35, %cst_20 {dimension_numbers = #tpu.dot_dimension_numbers<[1], [1], [0], [0], [0, 0, 1, 0], [], []>} : vector<8x8xbf16>, vector<8x8xbf16>, vector<8x8xf32> -> vector<8x8xf32>
    %cst_21 = arith.constant dense<0xFF800000> : vector<8xf32>
    %38 = vector.multi_reduction <maximumf>, %37, %cst_21 [1] : vector<8x8xf32> to vector<8xf32>
    %39 = vector.shape_cast %38 : vector<8xf32> to vector<8x1xf32>
    %40 = vector.broadcast %39 : vector<8x1xf32> to vector<8x8xf32>
    %41 = arith.subf %37, %40 : vector<8x8xf32>
    %42 = arith.truncf %41 : vector<8x8xf32> to vector<8x8xbf16>
    %43 = math.exp %42 : vector<8x8xbf16>
    %44 = arith.extf %43 : vector<8x8xbf16> to vector<8x8xf32>
    %cst_22 = arith.constant dense<0.000000e+00> : vector<8xf32>
    %45 = vector.multi_reduction <add>, %44, %cst_22 [1] : vector<8x8xf32> to vector<8xf32>
    %46 = vector.shape_cast %45 : vector<8xf32> to vector<8x1xf32>
    %cst_23 = arith.constant dense<0.000000e+00> : vector<8x8xf32>
    %47 = tpu.matmul %43, %36, %cst_23 {dimension_numbers = #tpu.dot_dimension_numbers<[1], [0], [0], [1], [0, 0, 1, 1], [], []>} : vector<8x8xbf16>, vector<8x8xbf16>, vector<8x8xf32> -> vector<8x8xf32>
    %48 = tpu.reciprocal %46 {approx = true} : vector<8x1xf32> -> vector<8x1xf32>
    %49 = vector.broadcast %48 : vector<8x1xf32> to vector<8x8xf32>
    %50 = arith.mulf %47, %49 : vector<8x8xf32>
    %51 = arith.truncf %50 : vector<8x8xf32> to vector<8x8xbf16>
    %c8_24 = arith.constant 8 : index
    %c0_25 = arith.constant 0 : index
    %52 = vector.load %arg7[%c8_24, %c0_25] : memref<32x32xbf16, #tpu.memory_space<vmem>>, vector<8x32xbf16>
    %cst_26 = arith.constant dense<0.000000e+00> : vector<8x32xf32>
    %53 = tpu.matmul %51, %52, %cst_26 {dimension_numbers = #tpu.dot_dimension_numbers<[1], [0], [0], [1], [0, 0, 1, 1], [], []>} : vector<8x8xbf16>, vector<8x32xbf16>, vector<8x32xf32> -> vector<8x32xf32>
    %54 = arith.addf %33, %53 : vector<8x32xf32>
    %55 = vector.extract_strided_slice %13 {offsets = [0, 16], sizes = [8, 8], strides = [1, 1]} : vector<8x32xbf16> to vector<8x8xbf16>
    %c0_27 = arith.constant 0 : index
    %c16 = arith.constant 16 : index
    %56 = vector.load %arg10[%c0_27, %c16] : memref<8x32xbf16, #tpu.memory_space<vmem>>, vector<8x8xbf16>
    %c0_28 = arith.constant 0 : index
    %c16_29 = arith.constant 16 : index
    %57 = vector.load %arg11[%c0_28, %c16_29] : memref<8x32xbf16, #tpu.memory_space<vmem>>, vector<8x8xbf16>
    %cst_30 = arith.constant dense<0.000000e+00> : vector<8x8xf32>
    %58 = tpu.matmul %55, %56, %cst_30 {dimension_numbers = #tpu.dot_dimension_numbers<[1], [1], [0], [0], [0, 0, 1, 0], [], []>} : vector<8x8xbf16>, vector<8x8xbf16>, vector<8x8xf32> -> vector<8x8xf32>
    %cst_31 = arith.constant dense<0xFF800000> : vector<8xf32>
    %59 = vector.multi_reduction <maximumf>, %58, %cst_31 [1] : vector<8x8xf32> to vector<8xf32>
    %60 = vector.shape_cast %59 : vector<8xf32> to vector<8x1xf32>
    %61 = vector.broadcast %60 : vector<8x1xf32> to vector<8x8xf32>
    %62 = arith.subf %58, %61 : vector<8x8xf32>
    %63 = arith.truncf %62 : vector<8x8xf32> to vector<8x8xbf16>
    %64 = math.exp %63 : vector<8x8xbf16>
    %65 = arith.extf %64 : vector<8x8xbf16> to vector<8x8xf32>
    %cst_32 = arith.constant dense<0.000000e+00> : vector<8xf32>
    %66 = vector.multi_reduction <add>, %65, %cst_32 [1] : vector<8x8xf32> to vector<8xf32>
    %67 = vector.shape_cast %66 : vector<8xf32> to vector<8x1xf32>
    %cst_33 = arith.constant dense<0.000000e+00> : vector<8x8xf32>
    %68 = tpu.matmul %64, %57, %cst_33 {dimension_numbers = #tpu.dot_dimension_numbers<[1], [0], [0], [1], [0, 0, 1, 1], [], []>} : vector<8x8xbf16>, vector<8x8xbf16>, vector<8x8xf32> -> vector<8x8xf32>
    %69 = tpu.reciprocal %67 {approx = true} : vector<8x1xf32> -> vector<8x1xf32>
    %70 = vector.broadcast %69 : vector<8x1xf32> to vector<8x8xf32>
    %71 = arith.mulf %68, %70 : vector<8x8xf32>
    %72 = arith.truncf %71 : vector<8x8xf32> to vector<8x8xbf16>
    %c16_34 = arith.constant 16 : index
    %c0_35 = arith.constant 0 : index
    %73 = vector.load %arg7[%c16_34, %c0_35] : memref<32x32xbf16, #tpu.memory_space<vmem>>, vector<8x32xbf16>
    %cst_36 = arith.constant dense<0.000000e+00> : vector<8x32xf32>
    %74 = tpu.matmul %72, %73, %cst_36 {dimension_numbers = #tpu.dot_dimension_numbers<[1], [0], [0], [1], [0, 0, 1, 1], [], []>} : vector<8x8xbf16>, vector<8x32xbf16>, vector<8x32xf32> -> vector<8x32xf32>
    %75 = arith.addf %54, %74 : vector<8x32xf32>
    %76 = vector.extract_strided_slice %13 {offsets = [0, 24], sizes = [8, 8], strides = [1, 1]} : vector<8x32xbf16> to vector<8x8xbf16>
    %c0_37 = arith.constant 0 : index
    %c24 = arith.constant 24 : index
    %77 = vector.load %arg10[%c0_37, %c24] : memref<8x32xbf16, #tpu.memory_space<vmem>>, vector<8x8xbf16>
    %c0_38 = arith.constant 0 : index
    %c24_39 = arith.constant 24 : index
    %78 = vector.load %arg11[%c0_38, %c24_39] : memref<8x32xbf16, #tpu.memory_space<vmem>>, vector<8x8xbf16>
    %cst_40 = arith.constant dense<0.000000e+00> : vector<8x8xf32>
    %79 = tpu.matmul %76, %77, %cst_40 {dimension_numbers = #tpu.dot_dimension_numbers<[1], [1], [0], [0], [0, 0, 1, 0], [], []>} : vector<8x8xbf16>, vector<8x8xbf16>, vector<8x8xf32> -> vector<8x8xf32>
    %cst_41 = arith.constant dense<0xFF800000> : vector<8xf32>
    %80 = vector.multi_reduction <maximumf>, %79, %cst_41 [1] : vector<8x8xf32> to vector<8xf32>
    %81 = vector.shape_cast %80 : vector<8xf32> to vector<8x1xf32>
    %82 = vector.broadcast %81 : vector<8x1xf32> to vector<8x8xf32>
    %83 = arith.subf %79, %82 : vector<8x8xf32>
    %84 = arith.truncf %83 : vector<8x8xf32> to vector<8x8xbf16>
    %85 = math.exp %84 : vector<8x8xbf16>
    %86 = arith.extf %85 : vector<8x8xbf16> to vector<8x8xf32>
    %cst_42 = arith.constant dense<0.000000e+00> : vector<8xf32>
    %87 = vector.multi_reduction <add>, %86, %cst_42 [1] : vector<8x8xf32> to vector<8xf32>
    %88 = vector.shape_cast %87 : vector<8xf32> to vector<8x1xf32>
    %cst_43 = arith.constant dense<0.000000e+00> : vector<8x8xf32>
    %89 = tpu.matmul %85, %78, %cst_43 {dimension_numbers = #tpu.dot_dimension_numbers<[1], [0], [0], [1], [0, 0, 1, 1], [], []>} : vector<8x8xbf16>, vector<8x8xbf16>, vector<8x8xf32> -> vector<8x8xf32>
    %90 = tpu.reciprocal %88 {approx = true} : vector<8x1xf32> -> vector<8x1xf32>
    %91 = vector.broadcast %90 : vector<8x1xf32> to vector<8x8xf32>
    %92 = arith.mulf %89, %91 : vector<8x8xf32>
    %93 = arith.truncf %92 : vector<8x8xf32> to vector<8x8xbf16>
    %c24_44 = arith.constant 24 : index
    %c0_45 = arith.constant 0 : index
    %94 = vector.load %arg7[%c24_44, %c0_45] : memref<32x32xbf16, #tpu.memory_space<vmem>>, vector<8x32xbf16>
    %cst_46 = arith.constant dense<0.000000e+00> : vector<8x32xf32>
    %95 = tpu.matmul %93, %94, %cst_46 {dimension_numbers = #tpu.dot_dimension_numbers<[1], [0], [0], [1], [0, 0, 1, 1], [], []>} : vector<8x8xbf16>, vector<8x32xbf16>, vector<8x32xf32> -> vector<8x32xf32>
    %96 = arith.addf %75, %95 : vector<8x32xf32>
    %c0_47 = arith.constant 0 : index
    %c0_48 = arith.constant 0 : index
    %97 = vector.load %arg8[%c0_47, %c0_48] : memref<1x32xf32, #tpu.memory_space<vmem>>, vector<1x32xf32>
    %98 = vector.broadcast %97 : vector<1x32xf32> to vector<8x32xf32>
    %99 = arith.addf %96, %98 : vector<8x32xf32>
    %c0_49 = arith.constant 0 : index
    %c0_50 = arith.constant 0 : index
    %c0_51 = arith.constant 0 : index
    %100 = vector.load %arg9[%c0_49, %c0_50, %c0_51] : memref<1x8x32xf32, #tpu.memory_space<vmem>>, vector<1x8x32xf32>
    %101 = vector.shape_cast %100 : vector<1x8x32xf32> to vector<8x32xf32>
    %102 = vector.shape_cast %99 : vector<8x32xf32> to vector<1x8x32xf32>
    tpu.vector_store %arg9[%c0_49, %c0_50, %c0_51], %102 {strides = array<i32>} : memref<1x8x32xf32, #tpu.memory_space<vmem>>, vector<1x8x32xf32>,
    return
  }
  func.func @transform_0(%arg0: i32, %arg1: i32) -> (i32, i32, i32) {
    %c0_i32 = arith.constant 0 : i32
    %c0_i32_0 = arith.constant 0 : i32
    %c0_i32_1 = arith.constant 0 : i32
    return %arg0, %c0_i32, %c0_i32_0 : i32, i32, i32
  }
  func.func @transform_1(%arg0: i32, %arg1: i32) -> (i32, i32) {
    %c0_i32 = arith.constant 0 : i32
    %c0_i32_0 = arith.constant 0 : i32
    %c0_i32_1 = arith.constant 0 : i32
    return %c0_i32, %c0_i32_0 : i32, i32
  }
  func.func @transform_2(%arg0: i32, %arg1: i32) -> (i32, i32) {
    %c0_i32 = arith.constant 0 : i32
    %c0_i32_0 = arith.constant 0 : i32
    %c0_i32_1 = arith.constant 0 : i32
    return %c0_i32, %c0_i32_0 : i32, i32
  }
  func.func @transform_3(%arg0: i32, %arg1: i32) -> (i32, i32) {
    %c0_i32 = arith.constant 0 : i32
    %c0_i32_0 = arith.constant 0 : i32
    %c0_i32_1 = arith.constant 0 : i32
    return %c0_i32, %c0_i32_0 : i32, i32
  }
  func.func @transform_4(%arg0: i32, %arg1: i32) -> (i32, i32) {
    %c0_i32 = arith.constant 0 : i32
    %c0_i32_0 = arith.constant 0 : i32
    %c0_i32_1 = arith.constant 0 : i32
    return %c0_i32, %c0_i32_0 : i32, i32
  }
  func.func @transform_5(%arg0: i32, %arg1: i32) -> (i32, i32) {
    %c0_i32 = arith.constant 0 : i32
    %c0_i32_0 = arith.constant 0 : i32
    %c0_i32_1 = arith.constant 0 : i32
    return %c0_i32, %c0_i32_0 : i32, i32
  }
  func.func @transform_6(%arg0: i32, %arg1: i32) -> (i32, i32) {
    %c0_i32 = arith.constant 0 : i32
    %c0_i32_0 = arith.constant 0 : i32
    %c0_i32_1 = arith.constant 0 : i32
    return %c0_i32, %c0_i32_0 : i32, i32
  }
  func.func @transform_7(%arg0: i32, %arg1: i32) -> (i32, i32, i32) {
    %c0_i32 = arith.constant 0 : i32
    %c0_i32_0 = arith.constant 0 : i32
    return %arg0, %arg1, %c0_i32 : i32, i32, i32
  }
}

</mosaic_0001>

<llo_original>
// kernel: tpu_custom_call.1
$region0: #{tpu_custom_call.1}
  #allocation0 [shape = 'u32[]', space=smem, size = 0x4, offset = 0x4, fixed_abs, tag = 'smem constant byte address 0x4 - core index']
  #allocation1 [shape = 'u32[72,128]{1,0:T(1,128)}', space=vmem, size = 0x9000, scoped, tag = 'internal scratch']
  #allocation2 [shape = 'bf16[8,32]{1,0:T(8,128)(2,1)}', space=vmem, size = 0x800, scoped, tag = 'scratch operand']
  #allocation3 [shape = 'bf16[8,32]{1,0:T(8,128)(2,1)}', space=vmem, size = 0x800, scoped, tag = 'scratch operand']
  %s0 = inlined_call_operand.hbm [shape: bf16[2,8,32], index: 0, kind: input, shape index: {}]
  %s1 = inlined_call_operand.hbm [shape: bf16[32,32], index: 1, kind: input, shape index: {}]
  %s2 = inlined_call_operand.vmem [shape: f32[1,32], index: 2, kind: input, shape index: {}]
  %s3 = inlined_call_operand.hbm [shape: bf16[32,64], index: 3, kind: input, shape index: {}]
  %s4 = inlined_call_operand.vmem [shape: f32[1,64], index: 4, kind: input, shape index: {}]
  %s5 = inlined_call_operand.hbm [shape: bf16[32,32], index: 5, kind: input, shape index: {}]
  %s6 = inlined_call_operand.vmem [shape: f32[1,32], index: 6, kind: input, shape index: {}]
  %s7 = inlined_call_operand.hbm [shape: f32[2,8,32], index: 7, kind: output, shape index: {}]
  %s8 = sld [smem:[#allocation0]]
  $region81: #{tpu_custom_call.1} parent=0
    _
  %s10 = ssub.s32 1, %s8
  %s11 = scalar_select 0, %s10, %s8
  $region1: #{tpu_custom_call.1} parent=0
    #allocation4 [shape = 'u8[4096]{0}', space=vmem, size = 0x1000, scoped, tag = 'input window, operand 0']
    #allocation5 [shape = 's32[2]{0}', space=sflag, size = 0x8, scoped, tag = 'scoped memory for tpu_custom_call.1']
    #allocation6 [shape = 's32[2]{0}', space=sflag, size = 0x8, scoped, tag = 'scoped memory for tpu_custom_call.1']
    #allocation7 [shape = 'u8[8192]{0}', space=vmem, size = 0x2000, scoped, tag = 'input window, operand 1, single buffered']
    #allocation8 [shape = 's32[1]{0}', space=sflag, size = 0x4, scoped, tag = 'scoped memory for tpu_custom_call.1']
    #allocation9 [shape = 'u8[8192]{0}', space=vmem, size = 0x2000, scoped, tag = 'input window, operand 3, single buffered']
    #allocation10 [shape = 'u8[8192]{0}', space=vmem, size = 0x2000, scoped, tag = 'input window, operand 5, single buffered']
    #allocation11 [shape = 's32[1]{0}', space=sflag, size = 0x4, scoped, tag = 'scoped memory for tpu_custom_call.1']
    #allocation12 [shape = 'u8[8192]{0}', space=vmem, size = 0x2000, scoped, tag = 'output window, operand 0']
    %12 = vsyncpa [#allocation5], 0
    %s13 = scalar_lea.sflag [#allocation5], 1
    %14 = vsyncpa %s13, 0
    %15 = vsyncpa [#allocation8], 0
    %16 = vsyncpa [#allocation11], 0
    %17 = vsyncpa [#allocation6], 0
    %s18 = scalar_lea.sflag [#allocation6], 1
    %19 = vsyncpa %s18, 0
    loop: start=0, step=1, limit=4
    $region2: #{tpu_custom_call.1} parent=1 // loop_pre_header
      _
    $region3: #{tpu_custom_call.1} parent=1 // loop_header
      %s21 = sphi 0, %s25
      %p22 = scmp.ge.s32.totalorder %s21, 4
      %s28 = sphi 0, %s40
      %s29 = sphi 0, %s36
      %s30 = sphi 0, %s28
      %s31 = sphi 0, %s29
      %s32 = sphi 0, %s30
      %s33 = sphi 0, %s31
      %s43 = sphi 0, %s45
      %s46 = sphi 0, %s43
      %s47 = sphi 0, %s46
      %s63 = sphi 0, %s47
      %s67 = sphi 0, %s67
      %s69 = sphi 0, %s67
      %s70 = sphi 0, %s69
      %s84 = sphi 0, %s70
      %s88 = sphi 0, %s88
      %s90 = sphi 0, %s88
      %s91 = sphi 0, %s90
      %s105 = sphi 0, %s91
      %s109 = sphi 0, %s109
      %s111 = sphi 0, %s109
      %s112 = sphi 0, %s111
      %s126 = sphi 0, %s112
      %s130 = sphi 0, %s130
      %s132 = sphi 0, %s130
      %s133 = sphi 0, %s132
      %s147 = sphi 0, %s133
      %s151 = sphi 0, %s151
      %s153 = sphi 0, %s151
      %s154 = sphi 0, %s153
      %s168 = sphi 0, %s154
      %s172 = sphi 0, %s172
      %s174 = sphi 0, %s172
      %s175 = sphi 0, %s174
      %s189 = sphi 0, %s175
      %s197 = sphi 0, %s199
      %s200 = sphi 0, %s197
      %s201 = sphi 0, %s200
      %s217 = sphi 0, %s201
    $region4: #{tpu_custom_call.1} parent=1 // loop_header_branch
      %24 = sbr.rel (%p22) target = $region8
    $region5: #{tpu_custom_call.1} parent=1 // loop_body
      %s26 = ssub.s32 %s21, 1
      %s27 = ssub.s32 %s21, 2
      %s34 = sadd.s32 1, %s29
      %p35 = scmp.ge.s32.totalorder %s34, 1
      %s36 = scalar_select %p35, 0, %s34
      %s37 = sadd.s32 1, %s28
      %s38 = scalar_select %p35, %s37, %s28
      %p39 = scmp.ge.s32.totalorder %s38, 2
      %s40 = scalar_select %p39, 0, %s38
      %s41 = ssub.s32 %s28, %s40
      %p42 = scmp.eq.s32.totalorder %s41, 0
      %s44 = sadd.s32 %s43, 1
      %s45 = scalar_select %p42, %s43, %s44
      %p48 = pneg %p42
      %p49 = scmp.eq.s32.totalorder %s21, 1
      %p50 = por %p48, %p49
      %p51 = scmp.ne.s32.totalorder %s43, %s46
      %p52 = scmp.eq.s32.totalorder %s21, 0
      %p53 = por %p51, %p52
      %p54 = scmp.ne.s32.totalorder %s43, %s46
      %p55 = scmp.eq.s32.totalorder %s26, 1
      %p56 = por %p54, %p55
      %p57 = scmp.ne.s32.totalorder %s46, %s47
      %p58 = scmp.eq.s32.totalorder %s26, 0
      %p59 = por %p57, %p58
      %p60 = scmp.ne.s32.totalorder %s46, %s47
      %p61 = scmp.eq.s32.totalorder %s27, 1
      %p62 = por %p60, %p61
      %p64 = scmp.ne.s32.totalorder %s47, %s63
      %p65 = scmp.eq.s32.totalorder %s27, 0
      %p66 = por %p64, %p65
      %s68 = sadd.s32 %s67, 1
      %p71 = scmp.eq.s32.totalorder %s21, 1
      %p72 = scmp.ne.s32.totalorder %s67, %s69
      %p73 = scmp.eq.s32.totalorder %s21, 0
      %p74 = por %p72, %p73
      %p75 = scmp.ne.s32.totalorder %s67, %s69
      %p76 = scmp.eq.s32.totalorder %s26, 1
      %p77 = por %p75, %p76
      %p78 = scmp.ne.s32.totalorder %s69, %s70
      %p79 = scmp.eq.s32.totalorder %s26, 0
      %p80 = por %p78, %p79
      %p81 = scmp.ne.s32.totalorder %s69, %s70
      %p82 = scmp.eq.s32.totalorder %s27, 1
      %p83 = por %p81, %p82
      %p85 = scmp.ne.s32.totalorder %s70, %s84
      %p86 = scmp.eq.s32.totalorder %s27, 0
      %p87 = por %p85, %p86
      %s89 = sadd.s32 %s88, 1
      %p92 = scmp.eq.s32.totalorder %s21, 1
      %p93 = scmp.ne.s32.totalorder %s88, %s90
      %p94 = scmp.eq.s32.totalorder %s21, 0
      %p95 = por %p93, %p94
      %p96 = scmp.ne.s32.totalorder %s88, %s90
      %p97 = scmp.eq.s32.totalorder %s26, 1
      %p98 = por %p96, %p97
      %p99 = scmp.ne.s32.totalorder %s90, %s91
      %p100 = scmp.eq.s32.totalorder %s26, 0
      %p101 = por %p99, %p100
      %p102 = scmp.ne.s32.totalorder %s90, %s91
      %p103 = scmp.eq.s32.totalorder %s27, 1
      %p104 = por %p102, %p103
      %p106 = scmp.ne.s32.totalorder %s91, %s105
      %p107 = scmp.eq.s32.totalorder %s27, 0
      %p108 = por %p106, %p107
      %s110 = sadd.s32 %s109, 1
      %p113 = scmp.eq.s32.totalorder %s21, 1
      %p114 = scmp.ne.s32.totalorder %s109, %s111
      %p115 = scmp.eq.s32.totalorder %s21, 0
      %p116 = por %p114, %p115
      %p117 = scmp.ne.s32.totalorder %s109, %s111
      %p118 = scmp.eq.s32.totalorder %s26, 1
      %p119 = por %p117, %p118
      %p120 = scmp.ne.s32.totalorder %s111, %s112
      %p121 = scmp.eq.s32.totalorder %s26, 0
      %p122 = por %p120, %p121
      %p123 = scmp.ne.s32.totalorder %s111, %s112
      %p124 = scmp.eq.s32.totalorder %s27, 1
      %p125 = por %p123, %p124
      %p127 = scmp.ne.s32.totalorder %s112, %s126
      %p128 = scmp.eq.s32.totalorder %s27, 0
      %p129 = por %p127, %p128
      %s131 = sadd.s32 %s130, 1
      %p134 = scmp.eq.s32.totalorder %s21, 1
      %p135 = scmp.ne.s32.totalorder %s130, %s132
      %p136 = scmp.eq.s32.totalorder %s21, 0
      %p137 = por %p135, %p136
      %p138 = scmp.ne.s32.totalorder %s130, %s132
      %p139 = scmp.eq.s32.totalorder %s26, 1
      %p140 = por %p138, %p139
      %p141 = scmp.ne.s32.totalorder %s132, %s133
      %p142 = scmp.eq.s32.totalorder %s26, 0
      %p143 = por %p141, %p142
      %p144 = scmp.ne.s32.totalorder %s132, %s133
      %p145 = scmp.eq.s32.totalorder %s27, 1
      %p146 = por %p144, %p145
      %p148 = scmp.ne.s32.totalorder %s133, %s147
      %p149 = scmp.eq.s32.totalorder %s27, 0
      %p150 = por %p148, %p149
      %s152 = sadd.s32 %s151, 1
      %p155 = scmp.eq.s32.totalorder %s21, 1
      %p156 = scmp.ne.s32.totalorder %s151, %s153
      %p157 = scmp.eq.s32.totalorder %s21, 0
      %p158 = por %p156, %p157
      %p159 = scmp.ne.s32.totalorder %s151, %s153
      %p160 = scmp.eq.s32.totalorder %s26, 1
      %p161 = por %p159, %p160
      %p162 = scmp.ne.s32.totalorder %s153, %s154
      %p163 = scmp.eq.s32.totalorder %s26, 0
      %p164 = por %p162, %p163
      %p165 = scmp.ne.s32.totalorder %s153, %s154
      %p166 = scmp.eq.s32.totalorder %s27, 1
      %p167 = por %p165, %p166
      %p169 = scmp.ne.s32.totalorder %s154, %s168
      %p170 = scmp.eq.s32.totalorder %s27, 0
      %p171 = por %p169, %p170
      %s173 = sadd.s32 %s172, 1
      %p176 = scmp.eq.s32.totalorder %s21, 1
      %p177 = scmp.ne.s32.totalorder %s172, %s174
      %p178 = scmp.eq.s32.totalorder %s21, 0
      %p179 = por %p177, %p178
      %p180 = scmp.ne.s32.totalorder %s172, %s174
      %p181 = scmp.eq.s32.totalorder %s26, 1
      %p182 = por %p180, %p181
      %p183 = scmp.ne.s32.totalorder %s174, %s175
      %p184 = scmp.eq.s32.totalorder %s26, 0
      %p185 = por %p183, %p184
      %p186 = scmp.ne.s32.totalorder %s174, %s175
      %p187 = scmp.eq.s32.totalorder %s27, 1
      %p188 = por %p186, %p187
      %p190 = scmp.ne.s32.totalorder %s175, %s189
      %p191 = scmp.eq.s32.totalorder %s27, 0
      %p192 = por %p190, %p191
      %s193 = ssub.s32 %s28, %s40
      %s194 = ssub.s32 %s29, %s36
      %s195 = sor.u32 %s193, %s194
      %p196 = scmp.eq.s32.totalorder %s195, 0
      %s198 = sadd.s32 %s197, 1
      %s199 = scalar_select %p196, %s197, %s198
      %p202 = pneg %p196
      %p203 = scmp.eq.s32.totalorder %s21, 1
      %p204 = por %p202, %p203
      %p205 = scmp.ne.s32.totalorder %s197, %s200
      %p206 = scmp.eq.s32.totalorder %s21, 0
      %p207 = por %p205, %p206
      %p208 = scmp.ne.s32.totalorder %s197, %s200
      %p209 = scmp.eq.s32.totalorder %s26, 1
      %p210 = por %p208, %p209
      %p211 = scmp.ne.s32.totalorder %s200, %s201
      %p212 = scmp.eq.s32.totalorder %s26, 0
      %p213 = por %p211, %p212
      %p214 = scmp.ne.s32.totalorder %s200, %s201
      %p215 = scmp.eq.s32.totalorder %s27, 1
      %p216 = por %p214, %p215
      %p218 = scmp.ne.s32.totalorder %s201, %s217
      %p219 = scmp.eq.s32.totalorder %s27, 0
      %p220 = por %p218, %p219
      %p221 = scmp.le.s32.totalorder 1, %s21
      %p222 = scmp.lt.s32.totalorder %s21, 3
      %p223 = pnand %p221, %p222
      %p224 = pneg %p223
      // Predicated region
      $region9: #{tpu_custom_call.1} parent=5 // pred_check
        _
      $region10: #{tpu_custom_call.1} parent=5 // pred_check_branch
        %226 = sbr.rel (%p223) target = $region12
      $region11: #{tpu_custom_call.1} parent=5 // pred_region
        %s227 = ssub.s32 %s21, 1
        // Predicated region
        $region13: #{tpu_custom_call.1} parent=11 // pred_check
          %p228 = pneg %p80
        $region14: #{tpu_custom_call.1} parent=11 // pred_check_branch
          %230 = sbr.rel (%p228) target = $region16
        $region15: #{tpu_custom_call.1} parent=11 // pred_region
          %232 = vsyncadd [#allocation8], 0
          %s233 = sshll.u32 %s1, 4
          %s234 = int_to_ptr.hbm [resolvable:$true] %s233
          %s235 = sshll.u32 [#allocation7], 4
          %s236 = int_to_ptr.vmem [resolvable:$true] %s235
          %241 = dma.hbm_to_vmem [thread:$0]  %s234, 256, %s236, [#allocation8], 64, 64, 4
        $region16: #{tpu_custom_call.1} parent=11 // pred_fallthru
          _
        // Predicated region
        $region17: #{tpu_custom_call.1} parent=11 // pred_check
          %p242 = pneg %p101
        $region18: #{tpu_custom_call.1} parent=11 // pred_check_branch
          %244 = sbr.rel (%p242) target = $region20
        $region19: #{tpu_custom_call.1} parent=11 // pred_region
          _
        $region20: #{tpu_custom_call.1} parent=11 // pred_fallthru
          _
        // Predicated region
        $region21: #{tpu_custom_call.1} parent=11 // pred_check
          %p245 = pneg %p122
        $region22: #{tpu_custom_call.1} parent=11 // pred_check_branch
          %247 = sbr.rel (%p245) target = $region24
        $region23: #{tpu_custom_call.1} parent=11 // pred_region
          %249 = vsyncadd [#allocation8], 0
          %s250 = sshll.u32 %s3, 4
          %s251 = int_to_ptr.hbm [resolvable:$true] %s250
          %s252 = sshll.u32 [#allocation9], 4
          %s253 = int_to_ptr.vmem [resolvable:$true] %s252
          %258 = dma.hbm_to_vmem [thread:$0]  %s251, 256, %s253, [#allocation8], 64, 64, 4
        $region24: #{tpu_custom_call.1} parent=11 // pred_fallthru
          _
        // Predicated region
        $region25: #{tpu_custom_call.1} parent=11 // pred_check
          %p259 = pneg %p143
        $region26: #{tpu_custom_call.1} parent=11 // pred_check_branch
          %261 = sbr.rel (%p259) target = $region28
        $region27: #{tpu_custom_call.1} parent=11 // pred_region
          _
        $region28: #{tpu_custom_call.1} parent=11 // pred_fallthru
          _
        // Predicated region
        $region29: #{tpu_custom_call.1} parent=11 // pred_check
          %p262 = pneg %p164
        $region30: #{tpu_custom_call.1} parent=11 // pred_check_branch
          %264 = sbr.rel (%p262) target = $region32
        $region31: #{tpu_custom_call.1} parent=11 // pred_region
          %266 = vsyncadd [#allocation11], 0
          %s267 = sshll.u32 %s5, 4
          %s268 = int_to_ptr.hbm [resolvable:$true] %s267
          %s269 = sshll.u32 [#allocation10], 4
          %s270 = int_to_ptr.vmem [resolvable:$true] %s269
          %275 = dma.hbm_to_vmem [thread:$0]  %s268, 256, %s270, [#allocation11], 64, 64, 4
        $region32: #{tpu_custom_call.1} parent=11 // pred_fallthru
          _
        // Predicated region
        $region33: #{tpu_custom_call.1} parent=11 // pred_check
          %p276 = pneg %p185
        $region34: #{tpu_custom_call.1} parent=11 // pred_check_branch
          %278 = sbr.rel (%p276) target = $region36
        $region35: #{tpu_custom_call.1} parent=11 // pred_region
          _
        $region36: #{tpu_custom_call.1} parent=11 // pred_fallthru
          _
      $region12: #{tpu_custom_call.1} parent=5 // pred_fallthru
        _
      %p279 = scmp.lt.s32.totalorder %s21, 2
      // Predicated region
      $region37: #{tpu_custom_call.1} parent=5 // pred_check
        %p280 = pneg %p279
      $region38: #{tpu_custom_call.1} parent=5 // pred_check_branch
        %282 = sbr.rel (%p280) target = $region40
      $region39: #{tpu_custom_call.1} parent=5 // pred_region
        // Predicated region
        $region41: #{tpu_custom_call.1} parent=39 // pred_check
          %p283 = pneg %p53
        $region42: #{tpu_custom_call.1} parent=39 // pred_check_branch
          %285 = sbr.rel (%p283) target = $region44
        $region43: #{tpu_custom_call.1} parent=39 // pred_region
          %s286 = sand.u32 %s43, 1
          %s287 = scalar_lea.sflag [#allocation5], %s286
          %s288 = sand.u32 %s43, 1
          %s289 = smul.addr %s288, 4
          %s290 = scalar_lea.vmem [#allocation4], %s289
          %292 = vsyncadd %s287, 0
          %s293 = smul.addr %s28, 4
          %s294 = scalar_lea.hbm %s0, %s293
          %s296 = sshll.u32 %s294, 4
          %s297 = int_to_ptr.hbm [resolvable:$true] %s296
          %s298 = sshll.u32 %s290, 4
          %s299 = int_to_ptr.vmem [resolvable:$true] %s298
          %301 = dma.hbm_to_vmem [thread:$0]  %s297, 64, %s299, %s287
        $region44: #{tpu_custom_call.1} parent=39 // pred_fallthru
          _
      $region40: #{tpu_custom_call.1} parent=5 // pred_fallthru
        _
      %p302 = scmp.le.s32.totalorder 1, %s21
      %p303 = scmp.lt.s32.totalorder %s21, 3
      %p304 = pnand %p302, %p303
      %p305 = pneg %p304
      // Predicated region
      $region45: #{tpu_custom_call.1} parent=5 // pred_check
        _
      $region46: #{tpu_custom_call.1} parent=5 // pred_check_branch
        %307 = sbr.rel (%p304) target = $region48
      $region47: #{tpu_custom_call.1} parent=5 // pred_region
        %s308 = ssub.s32 %s21, 1
        %s309 = sand.u32 %s46, 1
        %s310 = scalar_lea.sflag [#allocation5], %s309
        %s311 = sand.u32 %s46, 1
        %s312 = smul.addr %s311, 4
        %s313 = scalar_lea.vmem [#allocation4], %s312
        // Predicated region
        $region49: #{tpu_custom_call.1} parent=47 // pred_check
          %p314 = pneg %p59
        $region50: #{tpu_custom_call.1} parent=47 // pred_check_branch
          %316 = sbr.rel (%p314) target = $region52
        $region51: #{tpu_custom_call.1} parent=47 // pred_region
          %318 = dma.done %s310, 64
        $region52: #{tpu_custom_call.1} parent=47 // pred_fallthru
          _
        // Predicated region
        $region53: #{tpu_custom_call.1} parent=47 // pred_check
          %p319 = pneg %p80
        $region54: #{tpu_custom_call.1} parent=47 // pred_check_branch
          %321 = sbr.rel (%p319) target = $region56
        $region55: #{tpu_custom_call.1} parent=47 // pred_region
          %323 = dma.done [#allocation8], 256
        $region56: #{tpu_custom_call.1} parent=47 // pred_fallthru
          _
        // Predicated region
        $region57: #{tpu_custom_call.1} parent=47 // pred_check
          %p324 = pneg %p122
        $region58: #{tpu_custom_call.1} parent=47 // pred_check_branch
          %326 = sbr.rel (%p324) target = $region60
        $region59: #{tpu_custom_call.1} parent=47 // pred_region
          %328 = dma.done [#allocation8], 256
        $region60: #{tpu_custom_call.1} parent=47 // pred_fallthru
          _
        // Predicated region
        $region61: #{tpu_custom_call.1} parent=47 // pred_check
          %p329 = pneg %p164
        $region62: #{tpu_custom_call.1} parent=47 // pred_check_branch
          %331 = sbr.rel (%p329) target = $region64
        $region63: #{tpu_custom_call.1} parent=47 // pred_region
          %333 = dma.done [#allocation11], 256
        $region64: #{tpu_custom_call.1} parent=47 // pred_fallthru
          _
        %s334 = sand.u32 %s46, 1
        %s335 = scalar_lea.sflag [#allocation5], %s334
        %s336 = sand.u32 %s46, 1
        %s337 = smul.addr %s336, 4
        %s338 = scalar_lea.vmem [#allocation4], %s337
        %p339 = pneg %p59
        %p340 = pneg %p56
        %p341 = pneg %p80
        %p342 = pneg %p77
        %p343 = pneg %p101
        %p344 = pneg %p98
        %p345 = pneg %p122
        %p346 = pneg %p119
        %p347 = pneg %p143
        %p348 = pneg %p140
        %p349 = pneg %p164
        %p350 = pneg %p161
        %p351 = pneg %p185
        %p352 = pneg %p182
        %p353 = pneg %p213
        %p354 = pneg %p210
        %s355 = sand.u32 %s200, 1
        %s356 = scalar_lea.sflag [#allocation6], %s355
        %s357 = sand.u32 %s200, 1
        %s358 = smul.addr %s357, 8
        %s359 = scalar_lea.vmem [#allocation12], %s358
        %p361 = scmp.eq.s32.totalorder %s31, 0
        // Predicated region
        $region65: #{tpu_custom_call.1} parent=47 // pred_check
          %p362 = pneg %p361
        $region66: #{tpu_custom_call.1} parent=47 // pred_check_branch
          %364 = sbr.rel (%p362) target = $region68
        $region67: #{tpu_custom_call.1} parent=47 // pred_region
          %v365 = vld [vmem:[%s313] sm:$0xf]
          %v366 = vld [vmem:[#allocation9] sm:$0xf]
          %v367 = vld [vmem:[#allocation9 + $0x4] sm:$0xf]
          %v368 = vld [vmem:[#allocation9 + $0x8] sm:$0xf]
          %v369 = vld [vmem:[#allocation9 + $0xc] sm:$0xf]
          %v370 = vld [vmem:[%s4] sm:$0x1]
          %v372 = vperm.slane %v370, 0
          %v378 = vunpack.c.l.b16 %v366
          %v379 = vunpack.c.l.b16 %v367
          %v380 = vunpack.c.l.b16 %v368
          %v381 = vunpack.c.l.b16 %v369
          %v382 = vpack.c.b16 %v379, %v378
          %v383 = vpack.c.b16 %v381, %v380
          %vm386 = vcmask 261120
          %v388 = vsel %vm386, %v365, 0
          %390 = vmatpush.bf16.msra.mxu0 0
          %391 = vmatpush.bf16.msra.mxu0 0
          %392 = vmatpush.bf16.msra.mxu0 0
          %393 = vmatpush.bf16.msra.mxu0 0
          %394 = vmatpush.bf16.msra.mxu0 0
          %395 = vmatpush.bf16.msra.mxu0 0
          %396 = vmatpush.bf16.msra.mxu0 %v383
          %397 = vmatpush.bf16.msra.mxu0 %v382
          %398 = vmatmul.bf16.gmra.mxu0 %v388
          %v399 = vpop.f32.mrf.mxu0
          %v400 = vadd.f32 %v372, %v399
          %v401 = vpop.f32.mrf.mxu0
          %402 = vdwg.mxu0
          %v403 = vpack.c.bf16 %v400, %v400
          %vm404 = vcmask 257024
          %405 = vst.msk [vmem:[#allocation2] sm:$0xf] %vm404, %v403
          %407 = vrot.lane.b32.xlu0 %v403, 96
          %v408 = vpop.permute.xlu0 %407
          %410 = vst.msk [vmem:[#allocation3] sm:$0xf] %vm404, %v408
        $region68: #{tpu_custom_call.1} parent=47 // pred_fallthru
          _
        %s411 = smul.u32 %s31, 8
        %s412 = sshra.s32 %s411, 3
        %s413 = sand.u32 %s411, 7
        %s414 = smul.addr %s412, 4
        %s415 = scalar_lea.vmem %s313, %s414 [#allocation4]
        %v416 = vld [vmem:[%s415] sm:$0xf]
        %v417 = vld [vmem:[#allocation7] sm:$0xf]
        %v418 = vld [vmem:[#allocation7 + $0x4] sm:$0xf]
        %v419 = vld [vmem:[#allocation7 + $0x8] sm:$0xf]
        %v420 = vld [vmem:[#allocation7 + $0xc] sm:$0xf]
        %v421 = vld [vmem:[%s2] sm:$0x1]
        %v423 = vperm.slane %v421, 0
        %v429 = vunpack.c.l.b16 %v417
        %v430 = vunpack.c.l.b16 %v418
        %v431 = vunpack.c.l.b16 %v419
        %v432 = vunpack.c.l.b16 %v420
        %v433 = vpack.c.b16 %v430, %v429
        %v434 = vpack.c.b16 %v432, %v431
        %vm437 = vcmask 261120
        %v439 = vsel %vm437, %v416, 0
        %441 = vmatpush.bf16.msra.mxu0 0
        %442 = vmatpush.bf16.msra.mxu0 0
        %443 = vmatpush.bf16.msra.mxu0 0
        %444 = vmatpush.bf16.msra.mxu0 0
        %445 = vmatpush.bf16.msra.mxu0 0
        %446 = vmatpush.bf16.msra.mxu0 0
        %447 = vmatpush.bf16.msra.mxu0 %v434
        %448 = vmatpush.bf16.msra.mxu0 %v433
        %449 = vmatmul.bf16.gmra.mxu0 %v439
        %v450 = vpop.f32.mrf.mxu0
        %v451 = vadd.f32 %v423, %v450
        %v452 = vpop.f32.mrf.mxu0
        %453 = vdwg.mxu0
        %v454 = vpack.c.bf16 %v451, %v451
        %v455 = vld [vmem:[#allocation2] sm:$0xf]
        %v456 = vld [vmem:[#allocation3] sm:$0xf]
        %vm457 = vcmask 64512
        %v459 = vsel %vm457, %v454, 0
        %v462 = vsel %vm457, %v455, 0
        %464 = vmatpush.bf16.xpose.msra.mxu0 0
        %465 = vmatpush.bf16.xpose.msra.mxu0 0
        %466 = vmatpush.bf16.xpose.msra.mxu0 0
        %467 = vmatpush.bf16.xpose.msra.mxu0 0
        %468 = vmatpush.bf16.xpose.msra.mxu0 0
        %469 = vmatpush.bf16.xpose.msra.mxu0 0
        %470 = vmatpush.bf16.xpose.msra.mxu0 0
        %471 = vmatpush.bf16.xpose.msra.mxu0 %v462
        %472 = vmatmul.bf16.gmra.mxu0 %v459
        %v473 = vpop.f32.mrf.mxu0
        %v474 = vadd.f32 0.0, %v473
        %v475 = vpop.f32.mrf.mxu0
        %476 = vdwg.mxu0
        %v477 = vsel %vm457, %v474, -inf
        %478 = vmax.xlane.f32.xlu0 %v477
        %v479 = vpop.xlane.xlu0 %478
        %v480 = vsub.f32 %v474, %v479
        %v481 = vpack.c.bf16 %v480, %v480
        %v482 = vunpack.c.l.bf16 %v481
        %v483 = vmul.f32 %v482, 1.442695
        %v484 = vpow.pop %v483
        %v485 = vpack.c.bf16 %v484, %v484
        %v486 = vunpack.c.l.bf16 %v485
        %v487 = vsel %vm457, %v486, 0.0
        %488 = vadd.xlane.f32.xlu0 %v487
        %v489 = vpop.xlane.xlu0 %488
        %v491 = vsel %vm457, %v485, 0
        %vm493 = vcmask 1043456
        %v495 = vsel %vm493, %v456, 0
        %497 = vmatpush.bf16.msra.mxu0 0
        %498 = vmatpush.bf16.msra.mxu0 0
        %499 = vmatpush.bf16.msra.mxu0 0
        %500 = vmatpush.bf16.msra.mxu0 0
        %501 = vmatpush.bf16.msra.mxu0 0
        %502 = vmatpush.bf16.msra.mxu0 0
        %503 = vmatpush.bf16.msra.mxu0 0
        %504 = vmatpush.bf16.msra.mxu0 %v495
        %505 = vmatmul.bf16.gmra.mxu0 %v491
        %v506 = vpop.f32.mrf.mxu0
        %v507 = vadd.f32 0.0, %v506
        %v508 = vpop.f32.mrf.mxu0
        %509 = vdwg.mxu0
        %v510 = vrcp.pop %v489
        %v511 = vmul.f32 %v507, %v510
        %v512 = vpack.c.bf16 %v511, %v511
        %v513 = vld [vmem:[#allocation10] sm:$0xf]
        %v515 = vunpack.c.l.b16 %v454
        %v516 = vpack.c.b16 %v515, %v515
        %517 = vrot.lane.b32.xlu0 %v516, 120
        %v518 = vpop.permute.xlu0 %517
        %v520 = vunpack.c.l.b16 %v455
        %v521 = vpack.c.b16 %v520, %v520
        %522 = vrot.lane.b32.xlu0 %v521, 120
        %v523 = vpop.permute.xlu0 %522
        %v525 = vsel %vm457, %v518, 0
        %v528 = vsel %vm457, %v523, 0
        %530 = vmatpush.bf16.xpose.msra.mxu0 0
        %531 = vmatpush.bf16.xpose.msra.mxu0 0
        %532 = vmatpush.bf16.xpose.msra.mxu0 0
        %533 = vmatpush.bf16.xpose.msra.mxu0 0
        %534 = vmatpush.bf16.xpose.msra.mxu0 0
        %535 = vmatpush.bf16.xpose.msra.mxu0 0
        %536 = vmatpush.bf16.xpose.msra.mxu0 0
        %537 = vmatpush.bf16.xpose.msra.mxu0 %v528
        %538 = vmatmul.bf16.gmra.mxu0 %v525
        %v539 = vpop.f32.mrf.mxu0
        %v540 = vadd.f32 0.0, %v539
        %v541 = vpop.f32.mrf.mxu0
        %542 = vdwg.mxu0
        %v543 = vsel %vm457, %v540, -inf
        %544 = vmax.xlane.f32.xlu0 %v543
        %v545 = vpop.xlane.xlu0 %544
        %v546 = vsub.f32 %v540, %v545
        %v547 = vpack.c.bf16 %v546, %v546
        %v548 = vunpack.c.l.bf16 %v547
        %v549 = vmul.f32 %v548, 1.442695
        %v550 = vpow.pop %v549
        %v551 = vpack.c.bf16 %v550, %v550
        %v552 = vunpack.c.l.bf16 %v551
        %v553 = vsel %vm457, %v552, 0.0
        %554 = vadd.xlane.f32.xlu0 %v553
        %v555 = vpop.xlane.xlu0 %554
        %v557 = vunpack.c.l.b16 %v456
        %v558 = vpack.c.b16 %v557, %v557
        %559 = vrot.lane.b32.xlu0 %v558, 120
        %v560 = vpop.permute.xlu0 %559
        %v562 = vsel %vm457, %v551, 0
        %v565 = vsel %vm493, %v560, 0
        %567 = vmatpush.bf16.msra.mxu0 0
        %568 = vmatpush.bf16.msra.mxu0 0
        %569 = vmatpush.bf16.msra.mxu0 0
        %570 = vmatpush.bf16.msra.mxu0 0
        %571 = vmatpush.bf16.msra.mxu0 0
        %572 = vmatpush.bf16.msra.mxu0 0
        %573 = vmatpush.bf16.msra.mxu0 0
        %574 = vmatpush.bf16.msra.mxu0 %v565
        %575 = vmatmul.bf16.gmra.mxu0 %v562
        %v576 = vpop.f32.mrf.mxu0
        %v577 = vadd.f32 0.0, %v576
        %v578 = vpop.f32.mrf.mxu0
        %579 = vdwg.mxu0
        %v580 = vrcp.pop %v555
        %v581 = vmul.f32 %v577, %v580
        %v582 = vpack.c.bf16 %v581, %v581
        %v583 = vld [vmem:[#allocation10 + $0x4] sm:$0xf]
        %v585 = vsel %vm457, %v582, 0
        %v588 = vsel %vm493, %v583, 0
        %590 = vmatpush.bf16.msra.mxu0 0
        %591 = vmatpush.bf16.msra.mxu0 0
        %592 = vmatpush.bf16.msra.mxu0 0
        %593 = vmatpush.bf16.msra.mxu0 0
        %594 = vmatpush.bf16.msra.mxu0 0
        %595 = vmatpush.bf16.msra.mxu0 0
        %596 = vmatpush.bf16.msra.mxu0 0
        %597 = vmatpush.bf16.msra.mxu0 %v588
        %598 = vmatmul.bf16.gmra.mxu0 %v585
        %v599 = vpop.f32.mrf.mxu0
        %v600 = vadd.f32 0.0, %v599
        %v601 = vpop.f32.mrf.mxu0
        %602 = vdwg.mxu0
        %v604 = vsel %vm457, %v512, 0
        %v607 = vsel %vm493, %v513, 0
        %609 = vmatpush.bf16.msra.mxu0 0
        %610 = vmatpush.bf16.msra.mxu0 0
        %611 = vmatpush.bf16.msra.mxu0 0
        %612 = vmatpush.bf16.msra.mxu0 0
        %613 = vmatpush.bf16.msra.mxu0 0
        %614 = vmatpush.bf16.msra.mxu0 0
        %615 = vmatpush.bf16.msra.mxu0 0
        %616 = vmatpush.bf16.msra.mxu0 %v607
        %617 = vmatmul.bf16.gmra.mxu0 %v604
        %v618 = vpop.f32.mrf.mxu0
        %v619 = vadd.f32 %v600, %v618
        %v620 = vpop.f32.mrf.mxu0
        %621 = vdwg.mxu0
        %622 = vrot.lane.b32.xlu0 %v516, 112
        %v623 = vpop.permute.xlu0 %622
        %624 = vrot.lane.b32.xlu0 %v521, 112
        %v625 = vpop.permute.xlu0 %624
        %v627 = vsel %vm457, %v623, 0
        %v630 = vsel %vm457, %v625, 0
        %632 = vmatpush.bf16.xpose.msra.mxu0 0
        %633 = vmatpush.bf16.xpose.msra.mxu0 0
        %634 = vmatpush.bf16.xpose.msra.mxu0 0
        %635 = vmatpush.bf16.xpose.msra.mxu0 0
        %636 = vmatpush.bf16.xpose.msra.mxu0 0
        %637 = vmatpush.bf16.xpose.msra.mxu0 0
        %638 = vmatpush.bf16.xpose.msra.mxu0 0
        %639 = vmatpush.bf16.xpose.msra.mxu0 %v630
        %640 = vmatmul.bf16.gmra.mxu0 %v627
        %v641 = vpop.f32.mrf.mxu0
        %v642 = vadd.f32 0.0, %v641
        %v643 = vpop.f32.mrf.mxu0
        %644 = vdwg.mxu0
        %v645 = vsel %vm457, %v642, -inf
        %646 = vmax.xlane.f32.xlu0 %v645
        %v647 = vpop.xlane.xlu0 %646
        %v648 = vsub.f32 %v642, %v647
        %v649 = vpack.c.bf16 %v648, %v648
        %v650 = vunpack.c.l.bf16 %v649
        %v651 = vmul.f32 %v650, 1.442695
        %v652 = vpow.pop %v651
        %v653 = vpack.c.bf16 %v652, %v652
        %v654 = vunpack.c.l.bf16 %v653
        %v655 = vsel %vm457, %v654, 0.0
        %656 = vadd.xlane.f32.xlu0 %v655
        %v657 = vpop.xlane.xlu0 %656
        %658 = vrot.lane.b32.xlu0 %v558, 112
        %v659 = vpop.permute.xlu0 %658
        %v661 = vsel %vm457, %v653, 0
        %v664 = vsel %vm493, %v659, 0
        %666 = vmatpush.bf16.msra.mxu0 0
        %667 = vmatpush.bf16.msra.mxu0 0
        %668 = vmatpush.bf16.msra.mxu0 0
        %669 = vmatpush.bf16.msra.mxu0 0
        %670 = vmatpush.bf16.msra.mxu0 0
        %671 = vmatpush.bf16.msra.mxu0 0
        %672 = vmatpush.bf16.msra.mxu0 0
        %673 = vmatpush.bf16.msra.mxu0 %v664
        %674 = vmatmul.bf16.gmra.mxu0 %v661
        %v675 = vpop.f32.mrf.mxu0
        %v676 = vadd.f32 0.0, %v675
        %v677 = vpop.f32.mrf.mxu0
        %678 = vdwg.mxu0
        %v679 = vrcp.pop %v657
        %v680 = vmul.f32 %v676, %v679
        %v681 = vpack.c.bf16 %v680, %v680
        %v682 = vld [vmem:[#allocation10 + $0x8] sm:$0xf]
        %v684 = vsel %vm457, %v681, 0
        %v687 = vsel %vm493, %v682, 0
        %689 = vmatpush.bf16.msra.mxu0 0
        %690 = vmatpush.bf16.msra.mxu0 0
        %691 = vmatpush.bf16.msra.mxu0 0
        %692 = vmatpush.bf16.msra.mxu0 0
        %693 = vmatpush.bf16.msra.mxu0 0
        %694 = vmatpush.bf16.msra.mxu0 0
        %695 = vmatpush.bf16.msra.mxu0 0
        %696 = vmatpush.bf16.msra.mxu0 %v687
        %697 = vmatmul.bf16.gmra.mxu0 %v684
        %v698 = vpop.f32.mrf.mxu0
        %v699 = vadd.f32 0.0, %v698
        %v700 = vpop.f32.mrf.mxu0
        %701 = vdwg.mxu0
        %v702 = vadd.f32 %v619, %v699
        %703 = vrot.lane.b32.xlu0 %v516, 104
        %v704 = vpop.permute.xlu0 %703
        %705 = vrot.lane.b32.xlu0 %v521, 104
        %v706 = vpop.permute.xlu0 %705
        %v708 = vsel %vm457, %v704, 0
        %v711 = vsel %vm457, %v706, 0
        %713 = vmatpush.bf16.xpose.msra.mxu0 0
        %714 = vmatpush.bf16.xpose.msra.mxu0 0
        %715 = vmatpush.bf16.xpose.msra.mxu0 0
        %716 = vmatpush.bf16.xpose.msra.mxu0 0
        %717 = vmatpush.bf16.xpose.msra.mxu0 0
        %718 = vmatpush.bf16.xpose.msra.mxu0 0
        %719 = vmatpush.bf16.xpose.msra.mxu0 0
        %720 = vmatpush.bf16.xpose.msra.mxu0 %v711
        %721 = vmatmul.bf16.gmra.mxu0 %v708
        %v722 = vpop.f32.mrf.mxu0
        %v723 = vadd.f32 0.0, %v722
        %v724 = vpop.f32.mrf.mxu0
        %725 = vdwg.mxu0
        %v726 = vsel %vm457, %v723, -inf
        %727 = vmax.xlane.f32.xlu0 %v726
        %v728 = vpop.xlane.xlu0 %727
        %v729 = vsub.f32 %v723, %v728
        %v730 = vpack.c.bf16 %v729, %v729
        %v731 = vunpack.c.l.bf16 %v730
        %v732 = vmul.f32 %v731, 1.442695
        %v733 = vpow.pop %v732
        %v734 = vpack.c.bf16 %v733, %v733
        %v735 = vunpack.c.l.bf16 %v734
        %v736 = vsel %vm457, %v735, 0.0
        %737 = vadd.xlane.f32.xlu0 %v736
        %v738 = vpop.xlane.xlu0 %737
        %739 = vrot.lane.b32.xlu0 %v558, 104
        %v740 = vpop.permute.xlu0 %739
        %v742 = vsel %vm457, %v734, 0
        %v745 = vsel %vm493, %v740, 0
        %747 = vmatpush.bf16.msra.mxu0 0
        %748 = vmatpush.bf16.msra.mxu0 0
        %749 = vmatpush.bf16.msra.mxu0 0
        %750 = vmatpush.bf16.msra.mxu0 0
        %751 = vmatpush.bf16.msra.mxu0 0
        %752 = vmatpush.bf16.msra.mxu0 0
        %753 = vmatpush.bf16.msra.mxu0 0
        %754 = vmatpush.bf16.msra.mxu0 %v745
        %755 = vmatmul.bf16.gmra.mxu0 %v742
        %v756 = vpop.f32.mrf.mxu0
        %v757 = vadd.f32 0.0, %v756
        %v758 = vpop.f32.mrf.mxu0
        %759 = vdwg.mxu0
        %v760 = vrcp.pop %v738
        %v761 = vmul.f32 %v757, %v760
        %v762 = vpack.c.bf16 %v761, %v761
        %v763 = vld [vmem:[#allocation10 + $0xc] sm:$0xf]
        %v765 = vsel %vm457, %v762, 0
        %v768 = vsel %vm493, %v763, 0
        %770 = vmatpush.bf16.msra.mxu0 0
        %771 = vmatpush.bf16.msra.mxu0 0
        %772 = vmatpush.bf16.msra.mxu0 0
        %773 = vmatpush.bf16.msra.mxu0 0
        %774 = vmatpush.bf16.msra.mxu0 0
        %775 = vmatpush.bf16.msra.mxu0 0
        %776 = vmatpush.bf16.msra.mxu0 0
        %777 = vmatpush.bf16.msra.mxu0 %v768
        %778 = vmatmul.bf16.gmra.mxu0 %v765
        %v779 = vpop.f32.mrf.mxu0
        %v780 = vadd.f32 0.0, %v779
        %v781 = vpop.f32.mrf.mxu0
        %782 = vdwg.mxu0
        %v783 = vadd.f32 %v702, %v780
        %v784 = vld [vmem:[%s6] sm:$0x1]
        %v786 = vperm.slane %v784, 0
        %v788 = vadd.f32 %v783, %v786
        %789 = vst.msk [vmem:[%s359] sm:$0xff] %vm437, %v788
        %s790 = sand.u32 %s200, 1
        %s791 = scalar_lea.sflag [#allocation6], %s790
        %s792 = sand.u32 %s200, 1
        %s793 = smul.addr %s792, 8
        %s794 = scalar_lea.vmem [#allocation12], %s793
        // Predicated region
        $region69: #{tpu_custom_call.1} parent=47 // pred_check
          %p795 = pneg %p210
        $region70: #{tpu_custom_call.1} parent=47 // pred_check_branch
          %797 = sbr.rel (%p795) target = $region72
        $region71: #{tpu_custom_call.1} parent=47 // pred_region
          %799 = vsyncadd %s791, 0
          %s800 = sadd.s32 %s31, %s30
          %s801 = smul.addr %s800, 8
          %s802 = scalar_lea.hbm %s7, %s801
          %s804 = sshll.u32 %s794, 4
          %s805 = int_to_ptr.vmem [resolvable:$true] %s804
          %s806 = sshll.u32 %s802, 4
          %s807 = int_to_ptr.hbm [resolvable:$true] %s806
          %809 = dma.vmem_to_hbm [thread:$0]  %s805, 128, %s807, %s791
        $region72: #{tpu_custom_call.1} parent=47 // pred_fallthru
          _
      $region48: #{tpu_custom_call.1} parent=5 // pred_fallthru
        _
      %p810 = scmp.le.s32.totalorder 2, %s21
      // Predicated region
      $region73: #{tpu_custom_call.1} parent=5 // pred_check
        %p811 = pneg %p810
      $region74: #{tpu_custom_call.1} parent=5 // pred_check_branch
        %813 = sbr.rel (%p811) target = $region76
      $region75: #{tpu_custom_call.1} parent=5 // pred_region
        %s814 = ssub.s32 %s21, 2
        // Predicated region
        $region77: #{tpu_custom_call.1} parent=75 // pred_check
          %p815 = pneg %p216
        $region78: #{tpu_custom_call.1} parent=75 // pred_check_branch
          %817 = sbr.rel (%p815) target = $region80
        $region79: #{tpu_custom_call.1} parent=75 // pred_region
          %s818 = sand.u32 %s201, 1
          %s819 = scalar_lea.sflag [#allocation6], %s818
          %s820 = sand.u32 %s201, 1
          %s821 = smul.addr %s820, 8
          %s822 = scalar_lea.vmem [#allocation12], %s821
          %824 = dma.done %s819, 128
        $region80: #{tpu_custom_call.1} parent=75 // pred_fallthru
          _
      $region76: #{tpu_custom_call.1} parent=5 // pred_fallthru
        _
    $region6: #{tpu_custom_call.1} parent=1 // loop_footer
      %s25 = sadd.s32 1, %s21
    $region7: #{tpu_custom_call.1} parent=1 // loop_footer_branch
      %20 = sbr.rel target = $region3
    $region8: #{tpu_custom_call.1} parent=1 // loop_exit
      _
    %825 = vsyncpa [#allocation5], 1
    %s826 = scalar_lea.sflag [#allocation5], 1
    %827 = vsyncpa %s826, 1
    %828 = vsyncpa [#allocation8], 1
    %829 = vsyncpa [#allocation11], 1
    %830 = vsyncpa [#allocation6], 1
    %s831 = scalar_lea.sflag [#allocation6], 1
    %832 = vsyncpa %s831, 1

// kernel: tpu_custom_call.1
$region0: #{tpu_custom_call.1}
  #allocation0 [shape = 'u32[]', space=smem, size = 0x4, offset = 0x4, fixed_abs, tag = 'smem constant byte address 0x4 - core index']
  #allocation1 [shape = 'u32[72,128]{1,0:T(1,128)}', space=vmem, size = 0x9000, scoped, tag = 'internal scratch']
  #allocation2 [shape = 'bf16[8,32]{1,0:T(8,128)(2,1)}', space=vmem, size = 0x800, scoped, tag = 'scratch operand']
  #allocation3 [shape = 'bf16[8,32]{1,0:T(8,128)(2,1)}', space=vmem, size = 0x800, scoped, tag = 'scratch operand']
  %s0 = inlined_call_operand.hbm [shape: bf16[2,8,32], index: 0, kind: input, shape index: {}]
  %s1 = inlined_call_operand.hbm [shape: bf16[32,32], index: 1, kind: input, shape index: {}]
  %s2 = inlined_call_operand.vmem [shape: f32[1,32], index: 2, kind: input, shape index: {}]
  %s3 = inlined_call_operand.hbm [shape: bf16[32,64], index: 3, kind: input, shape index: {}]
  %s4 = inlined_call_operand.vmem [shape: f32[1,64], index: 4, kind: input, shape index: {}]
  %s5 = inlined_call_operand.hbm [shape: bf16[32,32], index: 5, kind: input, shape index: {}]
  %s6 = inlined_call_operand.vmem [shape: f32[1,32], index: 6, kind: input, shape index: {}]
  %s7 = inlined_call_operand.hbm [shape: f32[2,8,32], index: 7, kind: output, shape index: {}]
  %s8 = sld [smem:[#allocation0]]
  $region81: #{tpu_custom_call.1} parent=0
    _
  %s10 = ssub.s32 1, %s8
  %s11 = scalar_select 0, %s10, %s8
  $region1: #{tpu_custom_call.1} parent=0
    #allocation4 [shape = 'u8[4096]{0}', space=vmem, size = 0x1000, scoped, tag = 'input window, operand 0']
    #allocation5 [shape = 's32[2]{0}', space=sflag, size = 0x8, scoped, tag = 'scoped memory for tpu_custom_call.1']
    #allocation6 [shape = 's32[2]{0}', space=sflag, size = 0x8, scoped, tag = 'scoped memory for tpu_custom_call.1']
    #allocation7 [shape = 'u8[8192]{0}', space=vmem, size = 0x2000, scoped, tag = 'input window, operand 1, single buffered']
    #allocation8 [shape = 's32[1]{0}', space=sflag, size = 0x4, scoped, tag = 'scoped memory for tpu_custom_call.1']
    #allocation9 [shape = 'u8[8192]{0}', space=vmem, size = 0x2000, scoped, tag = 'input window, operand 3, single buffered']
    #allocation10 [shape = 'u8[8192]{0}', space=vmem, size = 0x2000, scoped, tag = 'input window, operand 5, single buffered']
    #allocation11 [shape = 's32[1]{0}', space=sflag, size = 0x4, scoped, tag = 'scoped memory for tpu_custom_call.1']
    #allocation12 [shape = 'u8[8192]{0}', space=vmem, size = 0x2000, scoped, tag = 'output window, operand 0']
    %12 = vsyncpa [#allocation5], 0
    %s13 = scalar_lea.sflag [#allocation5], 1
    %14 = vsyncpa %s13, 0
    %15 = vsyncpa [#allocation8], 0
    %16 = vsyncpa [#allocation11], 0
    %17 = vsyncpa [#allocation6], 0
    %s18 = scalar_lea.sflag [#allocation6], 1
    %19 = vsyncpa %s18, 0
    loop: start=0, step=1, limit=4
    $region2: #{tpu_custom_call.1} parent=1 // loop_pre_header
      _
    $region3: #{tpu_custom_call.1} parent=1 // loop_header
      %s21 = sphi 0, %s25
      %p22 = scmp.ge.s32.totalorder %s21, 4
      %s28 = sphi 0, %s40
      %s29 = sphi 0, %s36
      %s30 = sphi 0, %s28
      %s31 = sphi 0, %s29
      %s32 = sphi 0, %s30
      %s33 = sphi 0, %s31
      %s43 = sphi 0, %s45
      %s46 = sphi 0, %s43
      %s47 = sphi 0, %s46
      %s63 = sphi 0, %s47
      %s67 = sphi 0, %s67
      %s69 = sphi 0, %s67
      %s70 = sphi 0, %s69
      %s84 = sphi 0, %s70
      %s88 = sphi 0, %s88
      %s90 = sphi 0, %s88
      %s91 = sphi 0, %s90
      %s105 = sphi 0, %s91
      %s109 = sphi 0, %s109
      %s111 = sphi 0, %s109
      %s112 = sphi 0, %s111
      %s126 = sphi 0, %s112
      %s130 = sphi 0, %s130
      %s132 = sphi 0, %s130
      %s133 = sphi 0, %s132
      %s147 = sphi 0, %s133
      %s151 = sphi 0, %s151
      %s153 = sphi 0, %s151
      %s154 = sphi 0, %s153
      %s168 = sphi 0, %s154
      %s172 = sphi 0, %s172
      %s174 = sphi 0, %s172
      %s175 = sphi 0, %s174
      %s189 = sphi 0, %s175
      %s197 = sphi 0, %s199
      %s200 = sphi 0, %s197
      %s201 = sphi 0, %s200
      %s217 = sphi 0, %s201
    $region4: #{tpu_custom_call.1} parent=1 // loop_header_branch
      %24 = sbr.rel (%p22) target = $region8
    $region5: #{tpu_custom_call.1} parent=1 // loop_body
      %s26 = ssub.s32 %s21, 1
      %s27 = ssub.s32 %s21, 2
      %s34 = sadd.s32 1, %s29
      %p35 = scmp.ge.s32.totalorder %s34, 1
      %s36 = scalar_select %p35, 0, %s34
      %s37 = sadd.s32 1, %s28
      %s38 = scalar_select %p35, %s37, %s28
      %p39 = scmp.ge.s32.totalorder %s38, 2
      %s40 = scalar_select %p39, 0, %s38
      %s41 = ssub.s32 %s28, %s40
      %p42 = scmp.eq.s32.totalorder %s41, 0
      %s44 = sadd.s32 %s43, 1
      %s45 = scalar_select %p42, %s43, %s44
      %p48 = pneg %p42
      %p49 = scmp.eq.s32.totalorder %s21, 1
      %p50 = por %p48, %p49
      %p51 = scmp.ne.s32.totalorder %s43, %s46
      %p52 = scmp.eq.s32.totalorder %s21, 0
      %p53 = por %p51, %p52
      %p54 = scmp.ne.s32.totalorder %s43, %s46
      %p55 = scmp.eq.s32.totalorder %s26, 1
      %p56 = por %p54, %p55
      %p57 = scmp.ne.s32.totalorder %s46, %s47
      %p58 = scmp.eq.s32.totalorder %s26, 0
      %p59 = por %p57, %p58
      %p60 = scmp.ne.s32.totalorder %s46, %s47
      %p61 = scmp.eq.s32.totalorder %s27, 1
      %p62 = por %p60, %p61
      %p64 = scmp.ne.s32.totalorder %s47, %s63
      %p65 = scmp.eq.s32.totalorder %s27, 0
      %p66 = por %p64, %p65
      %s68 = sadd.s32 %s67, 1
      %p71 = scmp.eq.s32.totalorder %s21, 1
      %p72 = scmp.ne.s32.totalorder %s67, %s69
      %p73 = scmp.eq.s32.totalorder %s21, 0
      %p74 = por %p72, %p73
      %p75 = scmp.ne.s32.totalorder %s67, %s69
      %p76 = scmp.eq.s32.totalorder %s26, 1
      %p77 = por %p75, %p76
      %p78 = scmp.ne.s32.totalorder %s69, %s70
      %p79 = scmp.eq.s32.totalorder %s26, 0
      %p80 = por %p78, %p79
      %p81 = scmp.ne.s32.totalorder %s69, %s70
      %p82 = scmp.eq.s32.totalorder %s27, 1
      %p83 = por %p81, %p82
      %p85 = scmp.ne.s32.totalorder %s70, %s84
      %p86 = scmp.eq.s32.totalorder %s27, 0
      %p87 = por %p85, %p86
      %s89 = sadd.s32 %s88, 1
      %p92 = scmp.eq.s32.totalorder %s21, 1
      %p93 = scmp.ne.s32.totalorder %s88, %s90
      %p94 = scmp.eq.s32.totalorder %s21, 0
      %p95 = por %p93, %p94
      %p96 = scmp.ne.s32.totalorder %s88, %s90
      %p97 = scmp.eq.s32.totalorder %s26, 1
      %p98 = por %p96, %p97
      %p99 = scmp.ne.s32.totalorder %s90, %s91
      %p100 = scmp.eq.s32.totalorder %s26, 0
      %p101 = por %p99, %p100
      %p102 = scmp.ne.s32.totalorder %s90, %s91
      %p103 = scmp.eq.s32.totalorder %s27, 1
      %p104 = por %p102, %p103
      %p106 = scmp.ne.s32.totalorder %s91, %s105
      %p107 = scmp.eq.s32.totalorder %s27, 0
      %p108 = por %p106, %p107
      %s110 = sadd.s32 %s109, 1
      %p113 = scmp.eq.s32.totalorder %s21, 1
      %p114 = scmp.ne.s32.totalorder %s109, %s111
      %p115 = scmp.eq.s32.totalorder %s21, 0
      %p116 = por %p114, %p115
      %p117 = scmp.ne.s32.totalorder %s109, %s111
      %p118 = scmp.eq.s32.totalorder %s26, 1
      %p119 = por %p117, %p118
      %p120 = scmp.ne.s32.totalorder %s111, %s112
      %p121 = scmp.eq.s32.totalorder %s26, 0
      %p122 = por %p120, %p121
      %p123 = scmp.ne.s32.totalorder %s111, %s112
      %p124 = scmp.eq.s32.totalorder %s27, 1
      %p125 = por %p123, %p124
      %p127 = scmp.ne.s32.totalorder %s112, %s126
      %p128 = scmp.eq.s32.totalorder %s27, 0
      %p129 = por %p127, %p128
      %s131 = sadd.s32 %s130, 1
      %p134 = scmp.eq.s32.totalorder %s21, 1
      %p135 = scmp.ne.s32.totalorder %s130, %s132
      %p136 = scmp.eq.s32.totalorder %s21, 0
      %p137 = por %p135, %p136
      %p138 = scmp.ne.s32.totalorder %s130, %s132
      %p139 = scmp.eq.s32.totalorder %s26, 1
      %p140 = por %p138, %p139
      %p141 = scmp.ne.s32.totalorder %s132, %s133
      %p142 = scmp.eq.s32.totalorder %s26, 0
      %p143 = por %p141, %p142
      %p144 = scmp.ne.s32.totalorder %s132, %s133
      %p145 = scmp.eq.s32.totalorder %s27, 1
      %p146 = por %p144, %p145
      %p148 = scmp.ne.s32.totalorder %s133, %s147
      %p149 = scmp.eq.s32.totalorder %s27, 0
      %p150 = por %p148, %p149
      %s152 = sadd.s32 %s151, 1
      %p155 = scmp.eq.s32.totalorder %s21, 1
      %p156 = scmp.ne.s32.totalorder %s151, %s153
      %p157 = scmp.eq.s32.totalorder %s21, 0
      %p158 = por %p156, %p157
      %p159 = scmp.ne.s32.totalorder %s151, %s153
      %p160 = scmp.eq.s32.totalorder %s26, 1
      %p161 = por %p159, %p160
      %p162 = scmp.ne.s32.totalorder %s153, %s154
      %p163 = scmp.eq.s32.totalorder %s26, 0
      %p164 = por %p162, %p163
      %p165 = scmp.ne.s32.totalorder %s153, %s154
      %p166 = scmp.eq.s32.totalorder %s27, 1
      %p167 = por %p165, %p166
      %p169 = scmp.ne.s32.totalorder %s154, %s168
      %p170 = scmp.eq.s32.totalorder %s27, 0
      %p171 = por %p169, %p170
      %s173 = sadd.s32 %s172, 1
      %p176 = scmp.eq.s32.totalorder %s21, 1
      %p177 = scmp.ne.s32.totalorder %s172, %s174
      %p178 = scmp.eq.s32.totalorder %s21, 0
      %p179 = por %p177, %p178
      %p180 = scmp.ne.s32.totalorder %s172, %s174
      %p181 = scmp.eq.s32.totalorder %s26, 1
      %p182 = por %p180, %p181
      %p183 = scmp.ne.s32.totalorder %s174, %s175
      %p184 = scmp.eq.s32.totalorder %s26, 0
      %p185 = por %p183, %p184
      %p186 = scmp.ne.s32.totalorder %s174, %s175
      %p187 = scmp.eq.s32.totalorder %s27, 1
      %p188 = por %p186, %p187
      %p190 = scmp.ne.s32.totalorder %s175, %s189
      %p191 = scmp.eq.s32.totalorder %s27, 0
      %p192 = por %p190, %p191
      %s193 = ssub.s32 %s28, %s40
      %s194 = ssub.s32 %s29, %s36
      %s195 = sor.u32 %s193, %s194
      %p196 = scmp.eq.s32.totalorder %s195, 0
      %s198 = sadd.s32 %s197, 1
      %s199 = scalar_select %p196, %s197, %s198
      %p202 = pneg %p196
      %p203 = scmp.eq.s32.totalorder %s21, 1
      %p204 = por %p202, %p203
      %p205 = scmp.ne.s32.totalorder %s197, %s200
      %p206 = scmp.eq.s32.totalorder %s21, 0
      %p207 = por %p205, %p206
      %p208 = scmp.ne.s32.totalorder %s197, %s200
      %p209 = scmp.eq.s32.totalorder %s26, 1
      %p210 = por %p208, %p209
      %p211 = scmp.ne.s32.totalorder %s200, %s201
      %p212 = scmp.eq.s32.totalorder %s26, 0
      %p213 = por %p211, %p212
      %p214 = scmp.ne.s32.totalorder %s200, %s201
      %p215 = scmp.eq.s32.totalorder %s27, 1
      %p216 = por %p214, %p215
      %p218 = scmp.ne.s32.totalorder %s201, %s217
      %p219 = scmp.eq.s32.totalorder %s27, 0
      %p220 = por %p218, %p219
      %p221 = scmp.le.s32.totalorder 1, %s21
      %p222 = scmp.lt.s32.totalorder %s21, 3
      %p223 = pnand %p221, %p222
      %p224 = pneg %p223
      // Predicated region
      $region9: #{tpu_custom_call.1} parent=5 // pred_check
        _
      $region10: #{tpu_custom_call.1} parent=5 // pred_check_branch
        %226 = sbr.rel (%p223) target = $region12
      $region11: #{tpu_custom_call.1} parent=5 // pred_region
        %s227 = ssub.s32 %s21, 1
        // Predicated region
        $region13: #{tpu_custom_call.1} parent=11 // pred_check
          %p228 = pneg %p80
        $region14: #{tpu_custom_call.1} parent=11 // pred_check_branch
          %230 = sbr.rel (%p228) target = $region16
        $region15: #{tpu_custom_call.1} parent=11 // pred_region
          %232 = vsyncadd [#allocation8], 0
          %s233 = sshll.u32 %s1, 4
          %s234 = int_to_ptr.hbm [resolvable:$true] %s233
          %s235 = sshll.u32 [#allocation7], 4
          %s236 = int_to_ptr.vmem [resolvable:$true] %s235
          %241 = dma.hbm_to_vmem [thread:$0]  %s234, 256, %s236, [#allocation8], 64, 64, 4
        $region16: #{tpu_custom_call.1} parent=11 // pred_fallthru
          _
        // Predicated region
        $region17: #{tpu_custom_call.1} parent=11 // pred_check
          %p242 = pneg %p101
        $region18: #{tpu_custom_call.1} parent=11 // pred_check_branch
          %244 = sbr.rel (%p242) target = $region20
        $region19: #{tpu_custom_call.1} parent=11 // pred_region
          _
        $region20: #{tpu_custom_call.1} parent=11 // pred_fallthru
          _
        // Predicated region
        $region21: #{tpu_custom_call.1} parent=11 // pred_check
          %p245 = pneg %p122
        $region22: #{tpu_custom_call.1} parent=11 // pred_check_branch
          %247 = sbr.rel (%p245) target = $region24
        $region23: #{tpu_custom_call.1} parent=11 // pred_region
          %249 = vsyncadd [#allocation8], 0
          %s250 = sshll.u32 %s3, 4
          %s251 = int_to_ptr.hbm [resolvable:$true] %s250
          %s252 = sshll.u32 [#allocation9], 4
          %s253 = int_to_ptr.vmem [resolvable:$true] %s252
          %258 = dma.hbm_to_vmem [thread:$0]  %s251, 256, %s253, [#allocation8], 64, 64, 4
        $region24: #{tpu_custom_call.1} parent=11 // pred_fallthru
          _
        // Predicated region
        $region25: #{tpu_custom_call.1} parent=11 // pred_check
          %p259 = pneg %p143
        $region26: #{tpu_custom_call.1} parent=11 // pred_check_branch
          %261 = sbr.rel (%p259) target = $region28
        $region27: #{tpu_custom_call.1} parent=11 // pred_region
          _
        $region28: #{tpu_custom_call.1} parent=11 // pred_fallthru
          _
        // Predicated region
        $region29: #{tpu_custom_call.1} parent=11 // pred_check
          %p262 = pneg %p164
        $region30: #{tpu_custom_call.1} parent=11 // pred_check_branch
          %264 = sbr.rel (%p262) target = $region32
        $region31: #{tpu_custom_call.1} parent=11 // pred_region
          %266 = vsyncadd [#allocation11], 0
          %s267 = sshll.u32 %s5, 4
          %s268 = int_to_ptr.hbm [resolvable:$true] %s267
          %s269 = sshll.u32 [#allocation10], 4
          %s270 = int_to_ptr.vmem [resolvable:$true] %s269
          %275 = dma.hbm_to_vmem [thread:$0]  %s268, 256, %s270, [#allocation11], 64, 64, 4
        $region32: #{tpu_custom_call.1} parent=11 // pred_fallthru
          _
        // Predicated region
        $region33: #{tpu_custom_call.1} parent=11 // pred_check
          %p276 = pneg %p185
        $region34: #{tpu_custom_call.1} parent=11 // pred_check_branch
          %278 = sbr.rel (%p276) target = $region36
        $region35: #{tpu_custom_call.1} parent=11 // pred_region
          _
        $region36: #{tpu_custom_call.1} parent=11 // pred_fallthru
          _
      $region12: #{tpu_custom_call.1} parent=5 // pred_fallthru
        _
      %p279 = scmp.lt.s32.totalorder %s21, 2
      // Predicated region
      $region37: #{tpu_custom_call.1} parent=5 // pred_check
        %p280 = pneg %p279
      $region38: #{tpu_custom_call.1} parent=5 // pred_check_branch
        %282 = sbr.rel (%p280) target = $region40
      $region39: #{tpu_custom_call.1} parent=5 // pred_region
        // Predicated region
        $region41: #{tpu_custom_call.1} parent=39 // pred_check
          %p283 = pneg %p53
        $region42: #{tpu_custom_call.1} parent=39 // pred_check_branch
          %285 = sbr.rel (%p283) target = $region44
        $region43: #{tpu_custom_call.1} parent=39 // pred_region
          %s286 = sand.u32 %s43, 1
          %s287 = scalar_lea.sflag [#allocation5], %s286
          %s288 = sand.u32 %s43, 1
          %s289 = smul.addr %s288, 4
          %s290 = scalar_lea.vmem [#allocation4], %s289
          %292 = vsyncadd %s287, 0
          %s293 = smul.addr %s28, 4
          %s294 = scalar_lea.hbm %s0, %s293
          %s296 = sshll.u32 %s294, 4
          %s297 = int_to_ptr.hbm [resolvable:$true] %s296
          %s298 = sshll.u32 %s290, 4
          %s299 = int_to_ptr.vmem [resolvable:$true] %s298
          %301 = dma.hbm_to_vmem [thread:$0]  %s297, 64, %s299, %s287
        $region44: #{tpu_custom_call.1} parent=39 // pred_fallthru
          _
      $region40: #{tpu_custom_call.1} parent=5 // pred_fallthru
        _
      %p302 = scmp.le.s32.totalorder 1, %s21
      %p303 = scmp.lt.s32.totalorder %s21, 3
      %p304 = pnand %p302, %p303
      %p305 = pneg %p304
      // Predicated region
      $region45: #{tpu_custom_call.1} parent=5 // pred_check
        _
      $region46: #{tpu_custom_call.1} parent=5 // pred_check_branch
        %307 = sbr.rel (%p304) target = $region48
      $region47: #{tpu_custom_call.1} parent=5 // pred_region
        %s308 = ssub.s32 %s21, 1
        %s309 = sand.u32 %s46, 1
        %s310 = scalar_lea.sflag [#allocation5], %s309
        %s311 = sand.u32 %s46, 1
        %s312 = smul.addr %s311, 4
        %s313 = scalar_lea.vmem [#allocation4], %s312
        // Predicated region
        $region49: #{tpu_custom_call.1} parent=47 // pred_check
          %p314 = pneg %p59
        $region50: #{tpu_custom_call.1} parent=47 // pred_check_branch
          %316 = sbr.rel (%p314) target = $region52
        $region51: #{tpu_custom_call.1} parent=47 // pred_region
          %318 = dma.done %s310, 64
        $region52: #{tpu_custom_call.1} parent=47 // pred_fallthru
          _
        // Predicated region
        $region53: #{tpu_custom_call.1} parent=47 // pred_check
          %p319 = pneg %p80
        $region54: #{tpu_custom_call.1} parent=47 // pred_check_branch
          %321 = sbr.rel (%p319) target = $region56
        $region55: #{tpu_custom_call.1} parent=47 // pred_region
          %323 = dma.done [#allocation8], 256
        $region56: #{tpu_custom_call.1} parent=47 // pred_fallthru
          _
        // Predicated region
        $region57: #{tpu_custom_call.1} parent=47 // pred_check
          %p324 = pneg %p122
        $region58: #{tpu_custom_call.1} parent=47 // pred_check_branch
          %326 = sbr.rel (%p324) target = $region60
        $region59: #{tpu_custom_call.1} parent=47 // pred_region
          %328 = dma.done [#allocation8], 256
        $region60: #{tpu_custom_call.1} parent=47 // pred_fallthru
          _
        // Predicated region
        $region61: #{tpu_custom_call.1} parent=47 // pred_check
          %p329 = pneg %p164
        $region62: #{tpu_custom_call.1} parent=47 // pred_check_branch
          %331 = sbr.rel (%p329) target = $region64
        $region63: #{tpu_custom_call.1} parent=47 // pred_region
          %333 = dma.done [#allocation11], 256
        $region64: #{tpu_custom_call.1} parent=47 // pred_fallthru
          _
        %s334 = sand.u32 %s46, 1
        %s335 = scalar_lea.sflag [#allocation5], %s334
        %s336 = sand.u32 %s46, 1
        %s337 = smul.addr %s336, 4
        %s338 = scalar_lea.vmem [#allocation4], %s337
        %p339 = pneg %p59
        %p340 = pneg %p56
        %p341 = pneg %p80
        %p342 = pneg %p77
        %p343 = pneg %p101
        %p344 = pneg %p98
        %p345 = pneg %p122
        %p346 = pneg %p119
        %p347 = pneg %p143
        %p348 = pneg %p140
        %p349 = pneg %p164
        %p350 = pneg %p161
        %p351 = pneg %p185
        %p352 = pneg %p182
        %p353 = pneg %p213
        %p354 = pneg %p210
        %s355 = sand.u32 %s200, 1
        %s356 = scalar_lea.sflag [#allocation6], %s355
        %s357 = sand.u32 %s200, 1
        %s358 = smul.addr %s357, 8
        %s359 = scalar_lea.vmem [#allocation12], %s358
        %p361 = scmp.eq.s32.totalorder %s31, 0
        // Predicated region
        $region65: #{tpu_custom_call.1} parent=47 // pred_check
          %p362 = pneg %p361
        $region66: #{tpu_custom_call.1} parent=47 // pred_check_branch
          %364 = sbr.rel (%p362) target = $region68
        $region67: #{tpu_custom_call.1} parent=47 // pred_region
          %v365 = vld [vmem:[%s313] sm:$0xf]
          %v366 = vld [vmem:[#allocation9] sm:$0xf]
          %v367 = vld [vmem:[#allocation9 + $0x4] sm:$0xf]
          %v368 = vld [vmem:[#allocation9 + $0x8] sm:$0xf]
          %v369 = vld [vmem:[#allocation9 + $0xc] sm:$0xf]
          %v370 = vld [vmem:[%s4] sm:$0x1]
          %v372 = vperm.slane %v370, 0
          %v378 = vunpack.c.l.b16 %v366
          %v379 = vunpack.c.l.b16 %v367
          %v380 = vunpack.c.l.b16 %v368
          %v381 = vunpack.c.l.b16 %v369
          %v382 = vpack.c.b16 %v379, %v378
          %v383 = vpack.c.b16 %v381, %v380
          %vm386 = vcmask 261120
          %v388 = vsel %vm386, %v365, 0
          %390 = vmatpush.bf16.msra.mxu0 0
          %391 = vmatpush.bf16.msra.mxu0 0
          %392 = vmatpush.bf16.msra.mxu0 0
          %393 = vmatpush.bf16.msra.mxu0 0
          %394 = vmatpush.bf16.msra.mxu0 0
          %395 = vmatpush.bf16.msra.mxu0 0
          %396 = vmatpush.bf16.msra.mxu0 %v383
          %397 = vmatpush.bf16.msra.mxu0 %v382
          %398 = vmatmul.bf16.gmra.mxu0 %v388
          %v399 = vpop.f32.mrf.mxu0
          %v400 = vadd.f32 %v372, %v399
          %v401 = vpop.f32.mrf.mxu0
          %402 = vdwg.mxu0
          %v403 = vpack.c.bf16 %v400, %v400
          %vm404 = vcmask 257024
          %405 = vst.msk [vmem:[#allocation2] sm:$0xf] %vm404, %v403
          %407 = vrot.lane.b32.xlu0 %v403, 96
          %v408 = vpop.permute.xlu0 %407
          %410 = vst.msk [vmem:[#allocation3] sm:$0xf] %vm404, %v408
        $region68: #{tpu_custom_call.1} parent=47 // pred_fallthru
          _
        %s411 = smul.u32 %s31, 8
        %s412 = sshra.s32 %s411, 3
        %s413 = sand.u32 %s411, 7
        %s414 = smul.addr %s412, 4
        %s415 = scalar_lea.vmem %s313, %s414 [#allocation4]
        %v416 = vld [vmem:[%s415] sm:$0xf]
        %v417 = vld [vmem:[#allocation7] sm:$0xf]
        %v418 = vld [vmem:[#allocation7 + $0x4] sm:$0xf]
        %v419 = vld [vmem:[#allocation7 + $0x8] sm:$0xf]
        %v420 = vld [vmem:[#allocation7 + $0xc] sm:$0xf]
        %v421 = vld [vmem:[%s2] sm:$0x1]
        %v423 = vperm.slane %v421, 0
        %v429 = vunpack.c.l.b16 %v417
        %v430 = vunpack.c.l.b16 %v418
        %v431 = vunpack.c.l.b16 %v419
        %v432 = vunpack.c.l.b16 %v420
        %v433 = vpack.c.b16 %v430, %v429
        %v434 = vpack.c.b16 %v432, %v431
        %vm437 = vcmask 261120
        %v439 = vsel %vm437, %v416, 0
        %441 = vmatpush.bf16.msra.mxu0 0
        %442 = vmatpush.bf16.msra.mxu0 0
        %443 = vmatpush.bf16.msra.mxu0 0
        %444 = vmatpush.bf16.msra.mxu0 0
        %445 = vmatpush.bf16.msra.mxu0 0
        %446 = vmatpush.bf16.msra.mxu0 0
        %447 = vmatpush.bf16.msra.mxu0 %v434
        %448 = vmatpush.bf16.msra.mxu0 %v433
        %449 = vmatmul.bf16.gmra.mxu0 %v439
        %v450 = vpop.f32.mrf.mxu0
        %v451 = vadd.f32 %v423, %v450
        %v452 = vpop.f32.mrf.mxu0
        %453 = vdwg.mxu0
        %v454 = vpack.c.bf16 %v451, %v451
        %v455 = vld [vmem:[#allocation2] sm:$0xf]
        %v456 = vld [vmem:[#allocation3] sm:$0xf]
        %vm457 = vcmask 64512
        %v459 = vsel %vm457, %v454, 0
        %v462 = vsel %vm457, %v455, 0
        %464 = vmatpush.bf16.xpose.msra.mxu0 0
        %465 = vmatpush.bf16.xpose.msra.mxu0 0
        %466 = vmatpush.bf16.xpose.msra.mxu0 0
        %467 = vmatpush.bf16.xpose.msra.mxu0 0
        %468 = vmatpush.bf16.xpose.msra.mxu0 0
        %469 = vmatpush.bf16.xpose.msra.mxu0 0
        %470 = vmatpush.bf16.xpose.msra.mxu0 0
        %471 = vmatpush.bf16.xpose.msra.mxu0 %v462
        %472 = vmatmul.bf16.gmra.mxu0 %v459
        %v473 = vpop.f32.mrf.mxu0
        %v474 = vadd.f32 0.0, %v473
        %v475 = vpop.f32.mrf.mxu0
        %476 = vdwg.mxu0
        %v477 = vsel %vm457, %v474, -inf
        %478 = vmax.xlane.f32.xlu0 %v477
        %v479 = vpop.xlane.xlu0 %478
        %v480 = vsub.f32 %v474, %v479
        %v481 = vpack.c.bf16 %v480, %v480
        %v482 = vunpack.c.l.bf16 %v481
        %v483 = vmul.f32 %v482, 1.442695
        %v484 = vpow.pop %v483
        %v485 = vpack.c.bf16 %v484, %v484
        %v486 = vunpack.c.l.bf16 %v485
        %v487 = vsel %vm457, %v486, 0.0
        %488 = vadd.xlane.f32.xlu0 %v487
        %v489 = vpop.xlane.xlu0 %488
        %v491 = vsel %vm457, %v485, 0
        %vm493 = vcmask 1043456
        %v495 = vsel %vm493, %v456, 0
        %497 = vmatpush.bf16.msra.mxu0 0
        %498 = vmatpush.bf16.msra.mxu0 0
        %499 = vmatpush.bf16.msra.mxu0 0
        %500 = vmatpush.bf16.msra.mxu0 0
        %501 = vmatpush.bf16.msra.mxu0 0
        %502 = vmatpush.bf16.msra.mxu0 0
        %503 = vmatpush.bf16.msra.mxu0 0
        %504 = vmatpush.bf16.msra.mxu0 %v495
        %505 = vmatmul.bf16.gmra.mxu0 %v491
        %v506 = vpop.f32.mrf.mxu0
        %v507 = vadd.f32 0.0, %v506
        %v508 = vpop.f32.mrf.mxu0
        %509 = vdwg.mxu0
        %v510 = vrcp.pop %v489
        %v511 = vmul.f32 %v507, %v510
        %v512 = vpack.c.bf16 %v511, %v511
        %v513 = vld [vmem:[#allocation10] sm:$0xf]
        %v515 = vunpack.c.l.b16 %v454
        %v516 = vpack.c.b16 %v515, %v515
        %517 = vrot.lane.b32.xlu0 %v516, 120
        %v518 = vpop.permute.xlu0 %517
        %v520 = vunpack.c.l.b16 %v455
        %v521 = vpack.c.b16 %v520, %v520
        %522 = vrot.lane.b32.xlu0 %v521, 120
        %v523 = vpop.permute.xlu0 %522
        %v525 = vsel %vm457, %v518, 0
        %v528 = vsel %vm457, %v523, 0
        %530 = vmatpush.bf16.xpose.msra.mxu0 0
        %531 = vmatpush.bf16.xpose.msra.mxu0 0
        %532 = vmatpush.bf16.xpose.msra.mxu0 0
        %533 = vmatpush.bf16.xpose.msra.mxu0 0
        %534 = vmatpush.bf16.xpose.msra.mxu0 0
        %535 = vmatpush.bf16.xpose.msra.mxu0 0
        %536 = vmatpush.bf16.xpose.msra.mxu0 0
        %537 = vmatpush.bf16.xpose.msra.mxu0 %v528
        %538 = vmatmul.bf16.gmra.mxu0 %v525
        %v539 = vpop.f32.mrf.mxu0
        %v540 = vadd.f32 0.0, %v539
        %v541 = vpop.f32.mrf.mxu0
        %542 = vdwg.mxu0
        %v543 = vsel %vm457, %v540, -inf
        %544 = vmax.xlane.f32.xlu0 %v543
        %v545 = vpop.xlane.xlu0 %544
        %v546 = vsub.f32 %v540, %v545
        %v547 = vpack.c.bf16 %v546, %v546
        %v548 = vunpack.c.l.bf16 %v547
        %v549 = vmul.f32 %v548, 1.442695
        %v550 = vpow.pop %v549
        %v551 = vpack.c.bf16 %v550, %v550
        %v552 = vunpack.c.l.bf16 %v551
        %v553 = vsel %vm457, %v552, 0.0
        %554 = vadd.xlane.f32.xlu0 %v553
        %v555 = vpop.xlane.xlu0 %554
        %v557 = vunpack.c.l.b16 %v456
        %v558 = vpack.c.b16 %v557, %v557
        %559 = vrot.lane.b32.xlu0 %v558, 120
        %v560 = vpop.permute.xlu0 %559
        %v562 = vsel %vm457, %v551, 0
        %v565 = vsel %vm493, %v560, 0
        %567 = vmatpush.bf16.msra.mxu0 0
        %568 = vmatpush.bf16.msra.mxu0 0
        %569 = vmatpush.bf16.msra.mxu0 0
        %570 = vmatpush.bf16.msra.mxu0 0
        %571 = vmatpush.bf16.msra.mxu0 0
        %572 = vmatpush.bf16.msra.mxu0 0
        %573 = vmatpush.bf16.msra.mxu0 0
        %574 = vmatpush.bf16.msra.mxu0 %v565
        %575 = vmatmul.bf16.gmra.mxu0 %v562
        %v576 = vpop.f32.mrf.mxu0
        %v577 = vadd.f32 0.0, %v576
        %v578 = vpop.f32.mrf.mxu0
        %579 = vdwg.mxu0
        %v580 = vrcp.pop %v555
        %v581 = vmul.f32 %v577, %v580
        %v582 = vpack.c.bf16 %v581, %v581
        %v583 = vld [vmem:[#allocation10 + $0x4] sm:$0xf]
        %v585 = vsel %vm457, %v582, 0
        %v588 = vsel %vm493, %v583, 0
        %590 = vmatpush.bf16.msra.mxu0 0
        %591 = vmatpush.bf16.msra.mxu0 0
        %592 = vmatpush.bf16.msra.mxu0 0
        %593 = vmatpush.bf16.msra.mxu0 0
        %594 = vmatpush.bf16.msra.mxu0 0
        %595 = vmatpush.bf16.msra.mxu0 0
        %596 = vmatpush.bf16.msra.mxu0 0
        %597 = vmatpush.bf16.msra.mxu0 %v588
        %598 = vmatmul.bf16.gmra.mxu0 %v585
        %v599 = vpop.f32.mrf.mxu0
        %v600 = vadd.f32 0.0, %v599
        %v601 = vpop.f32.mrf.mxu0
        %602 = vdwg.mxu0
        %v604 = vsel %vm457, %v512, 0
        %v607 = vsel %vm493, %v513, 0
        %609 = vmatpush.bf16.msra.mxu0 0
        %610 = vmatpush.bf16.msra.mxu0 0
        %611 = vmatpush.bf16.msra.mxu0 0
        %612 = vmatpush.bf16.msra.mxu0 0
        %613 = vmatpush.bf16.msra.mxu0 0
        %614 = vmatpush.bf16.msra.mxu0 0
        %615 = vmatpush.bf16.msra.mxu0 0
        %616 = vmatpush.bf16.msra.mxu0 %v607
        %617 = vmatmul.bf16.gmra.mxu0 %v604
        %v618 = vpop.f32.mrf.mxu0
        %v619 = vadd.f32 %v600, %v618
        %v620 = vpop.f32.mrf.mxu0
        %621 = vdwg.mxu0
        %622 = vrot.lane.b32.xlu0 %v516, 112
        %v623 = vpop.permute.xlu0 %622
        %624 = vrot.lane.b32.xlu0 %v521, 112
        %v625 = vpop.permute.xlu0 %624
        %v627 = vsel %vm457, %v623, 0
        %v630 = vsel %vm457, %v625, 0
        %632 = vmatpush.bf16.xpose.msra.mxu0 0
        %633 = vmatpush.bf16.xpose.msra.mxu0 0
        %634 = vmatpush.bf16.xpose.msra.mxu0 0
        %635 = vmatpush.bf16.xpose.msra.mxu0 0
        %636 = vmatpush.bf16.xpose.msra.mxu0 0
        %637 = vmatpush.bf16.xpose.msra.mxu0 0
        %638 = vmatpush.bf16.xpose.msra.mxu0 0
        %639 = vmatpush.bf16.xpose.msra.mxu0 %v630
        %640 = vmatmul.bf16.gmra.mxu0 %v627
        %v641 = vpop.f32.mrf.mxu0
        %v642 = vadd.f32 0.0, %v641
        %v643 = vpop.f32.mrf.mxu0
        %644 = vdwg.mxu0
        %v645 = vsel %vm457, %v642, -inf
        %646 = vmax.xlane.f32.xlu0 %v645
        %v647 = vpop.xlane.xlu0 %646
        %v648 = vsub.f32 %v642, %v647
        %v649 = vpack.c.bf16 %v648, %v648
        %v650 = vunpack.c.l.bf16 %v649
        %v651 = vmul.f32 %v650, 1.442695
        %v652 = vpow.pop %v651
        %v653 = vpack.c.bf16 %v652, %v652
        %v654 = vunpack.c.l.bf16 %v653
        %v655 = vsel %vm457, %v654, 0.0
        %656 = vadd.xlane.f32.xlu0 %v655
        %v657 = vpop.xlane.xlu0 %656
        %658 = vrot.lane.b32.xlu0 %v558, 112
        %v659 = vpop.permute.xlu0 %658
        %v661 = vsel %vm457, %v653, 0
        %v664 = vsel %vm493, %v659, 0
        %666 = vmatpush.bf16.msra.mxu0 0
        %667 = vmatpush.bf16.msra.mxu0 0
        %668 = vmatpush.bf16.msra.mxu0 0
        %669 = vmatpush.bf16.msra.mxu0 0
        %670 = vmatpush.bf16.msra.mxu0 0
        %671 = vmatpush.bf16.msra.mxu0 0
        %672 = vmatpush.bf16.msra.mxu0 0
        %673 = vmatpush.bf16.msra.mxu0 %v664
        %674 = vmatmul.bf16.gmra.mxu0 %v661
        %v675 = vpop.f32.mrf.mxu0
        %v676 = vadd.f32 0.0, %v675
        %v677 = vpop.f32.mrf.mxu0
        %678 = vdwg.mxu0
        %v679 = vrcp.pop %v657
        %v680 = vmul.f32 %v676, %v679
        %v681 = vpack.c.bf16 %v680, %v680
        %v682 = vld [vmem:[#allocation10 + $0x8] sm:$0xf]
        %v684 = vsel %vm457, %v681, 0
        %v687 = vsel %vm493, %v682, 0
        %689 = vmatpush.bf16.msra.mxu0 0
        %690 = vmatpush.bf16.msra.mxu0 0
        %691 = vmatpush.bf16.msra.mxu0 0
        %692 = vmatpush.bf16.msra.mxu0 0
        %693 = vmatpush.bf16.msra.mxu0 0
        %694 = vmatpush.bf16.msra.mxu0 0
        %695 = vmatpush.bf16.msra.mxu0 0
        %696 = vmatpush.bf16.msra.mxu0 %v687
        %697 = vmatmul.bf16.gmra.mxu0 %v684
        %v698 = vpop.f32.mrf.mxu0
        %v699 = vadd.f32 0.0, %v698
        %v700 = vpop.f32.mrf.mxu0
        %701 = vdwg.mxu0
        %v702 = vadd.f32 %v619, %v699
        %703 = vrot.lane.b32.xlu0 %v516, 104
        %v704 = vpop.permute.xlu0 %703
        %705 = vrot.lane.b32.xlu0 %v521, 104
        %v706 = vpop.permute.xlu0 %705
        %v708 = vsel %vm457, %v704, 0
        %v711 = vsel %vm457, %v706, 0
        %713 = vmatpush.bf16.xpose.msra.mxu0 0
        %714 = vmatpush.bf16.xpose.msra.mxu0 0
        %715 = vmatpush.bf16.xpose.msra.mxu0 0
        %716 = vmatpush.bf16.xpose.msra.mxu0 0
        %717 = vmatpush.bf16.xpose.msra.mxu0 0
        %718 = vmatpush.bf16.xpose.msra.mxu0 0
        %719 = vmatpush.bf16.xpose.msra.mxu0 0
        %720 = vmatpush.bf16.xpose.msra.mxu0 %v711
        %721 = vmatmul.bf16.gmra.mxu0 %v708
        %v722 = vpop.f32.mrf.mxu0
        %v723 = vadd.f32 0.0, %v722
        %v724 = vpop.f32.mrf.mxu0
        %725 = vdwg.mxu0
        %v726 = vsel %vm457, %v723, -inf
        %727 = vmax.xlane.f32.xlu0 %v726
        %v728 = vpop.xlane.xlu0 %727
        %v729 = vsub.f32 %v723, %v728
        %v730 = vpack.c.bf16 %v729, %v729
        %v731 = vunpack.c.l.bf16 %v730
        %v732 = vmul.f32 %v731, 1.442695
        %v733 = vpow.pop %v732
        %v734 = vpack.c.bf16 %v733, %v733
        %v735 = vunpack.c.l.bf16 %v734
        %v736 = vsel %vm457, %v735, 0.0
        %737 = vadd.xlane.f32.xlu0 %v736
        %v738 = vpop.xlane.xlu0 %737
        %739 = vrot.lane.b32.xlu0 %v558, 104
        %v740 = vpop.permute.xlu0 %739
        %v742 = vsel %vm457, %v734, 0
        %v745 = vsel %vm493, %v740, 0
        %747 = vmatpush.bf16.msra.mxu0 0
        %748 = vmatpush.bf16.msra.mxu0 0
        %749 = vmatpush.bf16.msra.mxu0 0
        %750 = vmatpush.bf16.msra.mxu0 0
        %751 = vmatpush.bf16.msra.mxu0 0
        %752 = vmatpush.bf16.msra.mxu0 0
        %753 = vmatpush.bf16.msra.mxu0 0
        %754 = vmatpush.bf16.msra.mxu0 %v745
        %755 = vmatmul.bf16.gmra.mxu0 %v742
        %v756 = vpop.f32.mrf.mxu0
        %v757 = vadd.f32 0.0, %v756
        %v758 = vpop.f32.mrf.mxu0
        %759 = vdwg.mxu0
        %v760 = vrcp.pop %v738
        %v761 = vmul.f32 %v757, %v760
        %v762 = vpack.c.bf16 %v761, %v761
        %v763 = vld [vmem:[#allocation10 + $0xc] sm:$0xf]
        %v765 = vsel %vm457, %v762, 0
        %v768 = vsel %vm493, %v763, 0
        %770 = vmatpush.bf16.msra.mxu0 0
        %771 = vmatpush.bf16.msra.mxu0 0
        %772 = vmatpush.bf16.msra.mxu0 0
        %773 = vmatpush.bf16.msra.mxu0 0
        %774 = vmatpush.bf16.msra.mxu0 0
        %775 = vmatpush.bf16.msra.mxu0 0
        %776 = vmatpush.bf16.msra.mxu0 0
        %777 = vmatpush.bf16.msra.mxu0 %v768
        %778 = vmatmul.bf16.gmra.mxu0 %v765
        %v779 = vpop.f32.mrf.mxu0
        %v780 = vadd.f32 0.0, %v779
        %v781 = vpop.f32.mrf.mxu0
        %782 = vdwg.mxu0
        %v783 = vadd.f32 %v702, %v780
        %v784 = vld [vmem:[%s6] sm:$0x1]
        %v786 = vperm.slane %v784, 0
        %v788 = vadd.f32 %v783, %v786
        %789 = vst.msk [vmem:[%s359] sm:$0xff] %vm437, %v788
        %s790 = sand.u32 %s200, 1
        %s791 = scalar_lea.sflag [#allocation6], %s790
        %s792 = sand.u32 %s200, 1
        %s793 = smul.addr %s792, 8
        %s794 = scalar_lea.vmem [#allocation12], %s793
        // Predicated region
        $region69: #{tpu_custom_call.1} parent=47 // pred_check
          %p795 = pneg %p210
        $region70: #{tpu_custom_call.1} parent=47 // pred_check_branch
          %797 = sbr.rel (%p795) target = $region72
        $region71: #{tpu_custom_call.1} parent=47 // pred_region
          %799 = vsyncadd %s791, 0
          %s800 = sadd.s32 %s31, %s30
          %s801 = smul.addr %s800, 8
          %s802 = scalar_lea.hbm %s7, %s801
          %s804 = sshll.u32 %s794, 4
          %s805 = int_to_ptr.vmem [resolvable:$true] %s804
          %s806 = sshll.u32 %s802, 4
          %s807 = int_to_ptr.hbm [resolvable:$true] %s806
          %809 = dma.vmem_to_hbm [thread:$0]  %s805, 128, %s807, %s791
        $region72: #{tpu_custom_call.1} parent=47 // pred_fallthru
          _
      $region48: #{tpu_custom_call.1} parent=5 // pred_fallthru
        _
      %p810 = scmp.le.s32.totalorder 2, %s21
      // Predicated region
      $region73: #{tpu_custom_call.1} parent=5 // pred_check
        %p811 = pneg %p810
      $region74: #{tpu_custom_call.1} parent=5 // pred_check_branch
        %813 = sbr.rel (%p811) target = $region76
      $region75: #{tpu_custom_call.1} parent=5 // pred_region
        %s814 = ssub.s32 %s21, 2
        // Predicated region
        $region77: #{tpu_custom_call.1} parent=75 // pred_check
          %p815 = pneg %p216
        $region78: #{tpu_custom_call.1} parent=75 // pred_check_branch
          %817 = sbr.rel (%p815) target = $region80
        $region79: #{tpu_custom_call.1} parent=75 // pred_region
          %s818 = sand.u32 %s201, 1
          %s819 = scalar_lea.sflag [#allocation6], %s818
          %s820 = sand.u32 %s201, 1
          %s821 = smul.addr %s820, 8
          %s822 = scalar_lea.vmem [#allocation12], %s821
          %824 = dma.done %s819, 128
        $region80: #{tpu_custom_call.1} parent=75 // pred_fallthru
          _
      $region76: #{tpu_custom_call.1} parent=5 // pred_fallthru
        _
    $region6: #{tpu_custom_call.1} parent=1 // loop_footer
      %s25 = sadd.s32 1, %s21
    $region7: #{tpu_custom_call.1} parent=1 // loop_footer_branch
      %20 = sbr.rel target = $region3
    $region8: #{tpu_custom_call.1} parent=1 // loop_exit
      _
    %825 = vsyncpa [#allocation5], 1
    %s826 = scalar_lea.sflag [#allocation5], 1
    %827 = vsyncpa %s826, 1
    %828 = vsyncpa [#allocation8], 1
    %829 = vsyncpa [#allocation11], 1
    %830 = vsyncpa [#allocation6], 1
    %s831 = scalar_lea.sflag [#allocation6], 1
    %832 = vsyncpa %s831, 1

</llo_original>
